<compile_context>
chip_gen: v7x
topology: tpu7x:2x2x1
jax: 0.10.0
libtpu: 0.0.40
codegen_flags: <defaults>
</compile_context>

<pallas_src>
import jax
import jax.numpy as jnp
from jax import lax
from jax.experimental import pallas as pl
from jax.experimental.pallas import tpu as pltpu


def _rup(x, m):
    return (x + m - 1) // m * m


# ---------------- Pallas kernels (hot path) ----------------

def _mm_bias_prelu_kernel(w_ref, p_ref, b_ref, a_ref, o_ref, acc_ref):
    """out^T = PReLU(W @ patches^T + b) for one (cp, tm) tile, accumulated over K."""
    @pl.when(pl.program_id(1) == 0)
    def _():
        acc_ref[...] = jnp.zeros_like(acc_ref)

    acc_ref[...] += jnp.dot(w_ref[...], p_ref[...],
                            preferred_element_type=jnp.float32)

    @pl.when(pl.program_id(1) == pl.num_programs(1) - 1)
    def _():
        acc = acc_ref[...] + b_ref[...]              # (cp,tm) + (cp,1)
        a = a_ref[0]                                 # SMEM scalar
        y = jnp.maximum(acc, 0.0) + a * jnp.minimum(acc, 0.0)
        o_ref[...] = y.astype(o_ref.dtype)


def _mm_bias_prelu_res_kernel(w_ref, p_ref, b_ref, a_ref, res_ref, o_ref, acc_ref):
    """Same as above with a fused residual add in the epilogue (final conv)."""
    @pl.when(pl.program_id(1) == 0)
    def _():
        acc_ref[...] = jnp.zeros_like(acc_ref)

    acc_ref[...] += jnp.dot(w_ref[...], p_ref[...],
                            preferred_element_type=jnp.float32)

    @pl.when(pl.program_id(1) == pl.num_programs(1) - 1)
    def _():
        acc = acc_ref[...] + b_ref[...]
        a = a_ref[0]
        y = (jnp.maximum(acc, 0.0) + a * jnp.minimum(acc, 0.0)
             + res_ref[...].astype(jnp.float32))
        o_ref[...] = y.astype(o_ref.dtype)


def _prelu_sub_kernel(h_ref, x_ref, a_ref, o_ref):
    """o = PReLU(h) - x on a lane-dense (rows, 512) bf16 tile (f32 math)."""
    a = a_ref[0]
    h = h_ref[...].astype(jnp.float32)
    x = x_ref[...].astype(jnp.float32)
    y = jnp.maximum(h, 0.0) + a * jnp.minimum(h, 0.0) - x
    o_ref[...] = y.astype(o_ref.dtype)


# ---------------- Conv as tiled transposed implicit GEMM ----------------

_TM_MAX = 512   # lane-axis (M = N*Ho*Wo) tile ceiling
_TK_MAX = 512   # reduction-axis tile ceiling


def _pick_tm(m):
    """Lane-axis tile: lane-dense, and >=2 parallel blocks when the size allows
    (keeps both v7x TensorCores busy; harmless on v5e/v6e)."""
    mp = _rup(max(m, 1), 128)
    if mp <= 128:
        return 128
    half = mp // 2
    if half % 128 == 0 and half <= _TM_MAX:
        return half
    return min(_TM_MAX, mp)


def conv2d_act(x_cnhw, w_oihw, b, alpha, stride, pad, residual=None,
               out_dtype=jnp.bfloat16):
    """Conv + bias + PReLU (+ residual) on a CNHW bf16 tensor.

    Computes out^T (Cout, M) = W (Cout, K) @ patches^T (K, M) so the small Cout
    pads only to the sublane granule and M is the lane-dense store axis.
    """
    cout, cin, kh, kw = w_oihw.shape
    xb = x_cnhw.astype(jnp.bfloat16)

    # im2col as one fused XLA gather, already bf16 and already (K, M)-ordered
    # thanks to the CNHW dimension numbers (feature order is channel-major
    # (Cin, kh, kw), matching w.reshape(Cout, Cin*kh*kw)).
    patches = lax.conv_general_dilated_patches(
        xb, (kh, kw), (stride, stride), ((pad, pad), (pad, pad)),
        dimension_numbers=('CNHW', 'OIHW', 'CNHW'))
    k, n, ho, wo = patches.shape
    m = n * ho * wo
    pt = patches.reshape(k, m)

    wt = w_oihw.reshape(cout, cin * kh * kw).astype(jnp.bfloat16)   # (Cout, K)

    cp = _rup(cout, 16)                 # sublane granule (bf16 packing)
    tm = _pick_tm(m)
    tk = min(_TK_MAX, _rup(k, 128))
    mp = _rup(m, tm)
    kp = _rup(k, tk)

    pq = jnp.pad(pt, ((0, kp - k), (0, mp - m)))                    # bf16
    wq = jnp.pad(wt, ((0, cp - cout), (0, kp - k)))                 # bf16
    bq = jnp.pad(b.astype(jnp.float32), (0, cp - cout)).reshape(cp, 1)
    aq = jnp.reshape(jnp.asarray(alpha, jnp.float32), (1,))         # SMEM scalar

    grid = (mp // tm, kp // tk)
    in_specs = [
        pl.BlockSpec((cp, tk), lambda i, kk: (0, kk)),               # W tile
        pl.BlockSpec((tk, tm), lambda i, kk: (kk, i)),               # patches^T tile
        pl.BlockSpec((cp, 1), lambda i, kk: (0, 0)),                 # bias column
        pl.BlockSpec(memory_space=pltpu.MemorySpace.SMEM),           # alpha scalar
    ]
    out_spec = pl.BlockSpec((cp, tm), lambda i, kk: (0, i))
    cparams = pltpu.CompilerParams(
        dimension_semantics=("parallel", "arbitrary"),
        vmem_limit_bytes=48 * 1024 * 1024)
    flops = 2 * cp * mp * kp
    bytes_accessed = ((cp * kp + kp * mp) * 2
                      + cp * mp * jnp.dtype(out_dtype).itemsize + cp * 4)

    if residual is None:
        out = pl.pallas_call(
            _mm_bias_prelu_kernel,
            out_shape=jax.ShapeDtypeStruct((cp, mp), out_dtype),
            grid=grid, in_specs=in_specs, out_specs=out_spec,
            scratch_shapes=[pltpu.VMEM((cp, tm), jnp.float32)],
            compiler_params=cparams,
            cost_estimate=pl.CostEstimate(flops=flops, transcendentals=0,
                                          bytes_accessed=bytes_accessed),
        )(wq, pq, bq, aq)
    else:
        rq = jnp.pad(residual.reshape(cout, m).astype(jnp.bfloat16),
                     ((0, cp - cout), (0, mp - m)))
        out = pl.pallas_call(
            _mm_bias_prelu_res_kernel,
            out_shape=jax.ShapeDtypeStruct((cp, mp), out_dtype),
            grid=grid,
            in_specs=in_specs + [pl.BlockSpec((cp, tm), lambda i, kk: (0, i))],
            out_specs=out_spec,
            scratch_shapes=[pltpu.VMEM((cp, tm), jnp.float32)],
            compiler_params=cparams,
            cost_estimate=pl.CostEstimate(flops=flops, transcendentals=0,
                                          bytes_accessed=bytes_accessed + cp * mp * 2),
        )(wq, pq, bq, aq, rq)

    # Tiny slice: only the (cout - cp) padded sublanes / (m - mp) padded lanes.
    return out[:cout, :m].reshape(cout, n, ho, wo)


# ---------------- Lane-dense fused PReLU(h0) - x (bf16) ----------------

_LANE = 512   # lane-block width (multiple of 128) -> unmasked stores


def prelu_sub(h, x, alpha):
    shape = h.shape
    t = h.size
    rows0 = _rup(max((t + _LANE - 1) // _LANE, 1), 16)   # bf16 sublane granule
    if rows0 >= 32:
        rb = min(256, _rup(rows0 // 2, 16))              # >=2 parallel blocks
    else:
        rb = rows0
    rows = _rup(rows0, rb)
    tp = rows * _LANE

    hq = jnp.pad(h.reshape(-1).astype(jnp.bfloat16), (0, tp - t)).reshape(rows, _LANE)
    xq = jnp.pad(x.reshape(-1).astype(jnp.bfloat16), (0, tp - t)).reshape(rows, _LANE)
    aq = jnp.reshape(jnp.asarray(alpha, jnp.float32), (1,))

    out = pl.pallas_call(
        _prelu_sub_kernel,
        out_shape=jax.ShapeDtypeStruct((rows, _LANE), jnp.bfloat16),
        grid=(rows // rb,),
        in_specs=[pl.BlockSpec((rb, _LANE), lambda i: (i, 0)),
                  pl.BlockSpec((rb, _LANE), lambda i: (i, 0)),
                  pl.BlockSpec(memory_space=pltpu.MemorySpace.SMEM)],
        out_specs=pl.BlockSpec((rb, _LANE), lambda i: (i, 0)),
        compiler_params=pltpu.CompilerParams(
            dimension_semantics=("parallel",),
            vmem_limit_bytes=48 * 1024 * 1024),
    )(hq, xq, aq)
    return out.reshape(-1)[:t].reshape(shape)


# ---------------- Glue: pixel shuffle in CNHW (pure layout, bf16) ----------------

def _pixel_shuffle_cnhw(x, r):
    # PyTorch PixelShuffle: out[n, c, rh+i, rw+j] = in[n, c*r*r + i*r + j, h, w]
    c4, n, h, w = x.shape
    c = c4 // (r * r)
    x = x.reshape(c, r, r, n, h, w)
    x = jnp.transpose(x, (0, 3, 4, 1, 5, 2))
    return x.reshape(c, n, h * r, w * r)


# ---------------- DownBlockPix forward ----------------

def down_block_pix_forward(x_nchw, p):
    # NCHW -> CNHW bf16 once at the module boundary.
    xb = jnp.transpose(x_nchw, (1, 0, 2, 3)).astype(jnp.bfloat16)
    # down_conv1: conv 8x8, stride 4, pad 2, bias, PReLU
    l0 = conv2d_act(xb, p['w1'], p['b1'], p['a1'], stride=4, pad=2)
    # down_conv2: Upsampler(4) = 2x [conv3x3 C->4C (no act) + PixelShuffle(2)], then PReLU
    u = l0
    for wk, bk in (('wu1', 'bu1'), ('wu2', 'bu2')):
        u = conv2d_act(u, p[wk], p[bk], 1.0, stride=1, pad=1)        # alpha=1 -> identity
        u = _pixel_shuffle_cnhw(u, 2)
    # fused: d = PReLU(u) - x   (lane-dense elementwise kernel, bf16 in/out)
    d = prelu_sub(u, xb, p['au'])
    # down_conv3 on d, with the final "+ l0" fused as a residual; store module output f32.
    out = conv2d_act(d, p['w3'], p['b3'], p['a3'], stride=4, pad=2,
                     residual=l0, out_dtype=jnp.float32)
    return jnp.transpose(out, (1, 0, 2, 3))                           # CNHW -> NCHW


def init_params(key, c):
    ks = jax.random.split(key, 8)
    f = lambda k, shape, s=0.05: jax.random.normal(k, shape, jnp.float32) * s
    return dict(
        w1=f(ks[0], (c, c, 8, 8)), b1=f(ks[1], (c,)), a1=jnp.float32(0.25),
        wu1=f(ks[2], (4 * c, c, 3, 3)), bu1=f(ks[3], (4 * c,)),
        wu2=f(ks[4], (4 * c, c, 3, 3)), bu2=f(ks[5], (4 * c,)),
        au=jnp.float32(0.25),
        w3=f(ks[6], (c, c, 8, 8)), b3=f(ks[7], (c,)), a3=jnp.float32(0.25),
    )


# ---------------- Pure-JAX reference (for correctness check) ----------------

def _ref_conv(x, w, b, stride, pad):
    y = lax.conv_general_dilated(x, w, (stride, stride), ((pad, pad), (pad, pad)),
                                 dimension_numbers=('NCHW', 'OIHW', 'NCHW'),
                                 precision=lax.Precision.HIGHEST)
    return y + b[None, :, None, None]


def _ref_prelu(x, a):
    return jnp.where(x >= 0, x, a * x)


def _ref_pixel_shuffle(x, r):
    n, c4, h, w = x.shape
    c = c4 // (r * r)
    x = x.reshape(n, c, r, r, h, w)
    x = jnp.transpose(x, (0, 1, 4, 2, 5, 3))
    return x.reshape(n, c, h * r, w * r)


def ref_forward(x, p):
    l0 = _ref_prelu(_ref_conv(x, p['w1'], p['b1'], 4, 2), p['a1'])
    u = l0
    for wk, bk in (('wu1', 'bu1'), ('wu2', 'bu2')):
        u = _ref_pixel_shuffle(_ref_conv(u, p[wk], p[bk], 1, 1), 2)
    h0 = _ref_prelu(u, p['au'])
    l1 = _ref_prelu(_ref_conv(h0 - x, p['w3'], p['b3'], 4, 2), p['a3'])
    return l1 + l0


if __name__ == "__main__":
    key = jax.random.PRNGKey(0)
    kx, kparam = jax.random.split(key)
    C = 8  # num_filter
    x = jax.random.normal(kx, (2, C, 16, 16), jnp.float32)
    params = init_params(kparam, C)

    out = jax.block_until_ready(jax.jit(down_block_pix_forward)(x, params))

    ref = ref_forward(x, params)
    assert out.shape == ref.shape == (2, C, 4, 4), (out.shape, ref.shape)
    err = float(jnp.max(jnp.abs(out - ref)))
    # bf16 MXU operands + bf16 intermediates (f32 accumulation / epilogue)
    # => tolerance loosened vs the f32 reference.
    assert jnp.allclose(out, ref, atol=5e-2, rtol=5e-2), err
    print("KERNEL_OK")
</pallas_src>

<mosaic_0001>
module attributes {stable_mosaic.version = 11 : i64} {
  func.func @_mm_bias_prelu_kernel(%arg0: i32, %arg1: i32, %arg2: memref<16x512xbf16, #tpu.memory_space<vmem>>, %arg3: memref<512x128xbf16, #tpu.memory_space<vmem>>, %arg4: memref<16x1xf32, #tpu.memory_space<vmem>>, %arg5: memref<1xf32, #tpu.memory_space<smem>>, %arg6: memref<16x128xbf16, #tpu.memory_space<vmem>>, %arg7: memref<16x128xf32, #tpu.memory_space<vmem>>) attributes {dimension_semantics = [#tpu.dimension_semantics<parallel>, #tpu.dimension_semantics<arbitrary>], iteration_bounds = array<i64: 1, 1>, scalar_prefetch = 0 : i64, scratch_operands = 1 : i64, tpu.core_type = #tpu.core_type<tc>, window_params = [{transform_indices = @transform_0, window_bounds = array<i64: 16, 512>}, {transform_indices = @transform_1, window_bounds = array<i64: 512, 128>}, {pipeline_mode = #tpu.pipeline_mode<synchronous>, transform_indices = @transform_2, window_bounds = array<i64: 16, 1>}, {transform_indices = @transform_3, window_bounds = array<i64: 1>}, {transform_indices = @transform_4, window_bounds = array<i64: 16, 128>}]} {
    %c0_i32 = arith.constant 0 : i32
    %0 = arith.cmpi eq, %arg1, %c0_i32 : i32
    %1 = arith.extui %0 : i1 to i32
    %c0_i32_0 = arith.constant 0 : i32
    %2 = arith.cmpi ne, %1, %c0_i32_0 : i32
    scf.if %2 {
      %cst_10 = arith.constant 0.000000e+00 : f32
      %12 = vector.broadcast %cst_10 : f32 to vector<16x128xf32>
      %c0_11 = arith.constant 0 : index
      %c0_12 = arith.constant 0 : index
      %13 = vector.load %arg7[%c0_11, %c0_12] : memref<16x128xf32, #tpu.memory_space<vmem>>, vector<16x128xf32>
      tpu.vector_store %arg7[%c0_11, %c0_12], %12 {strides = array<i32>} : memref<16x128xf32, #tpu.memory_space<vmem>>, vector<16x128xf32>,
    } else {
    }
    %c0 = arith.constant 0 : index
    %c0_1 = arith.constant 0 : index
    %3 = vector.load %arg7[%c0, %c0_1] : memref<16x128xf32, #tpu.memory_space<vmem>>, vector<16x128xf32>
    %c0_2 = arith.constant 0 : index
    %c0_3 = arith.constant 0 : index
    %4 = vector.load %arg2[%c0_2, %c0_3] : memref<16x512xbf16, #tpu.memory_space<vmem>>, vector<16x512xbf16>
    %c0_4 = arith.constant 0 : index
    %c0_5 = arith.constant 0 : index
    %5 = vector.load %arg3[%c0_4, %c0_5] : memref<512x128xbf16, #tpu.memory_space<vmem>>, vector<512x128xbf16>
    %cst = arith.constant dense<0.000000e+00> : vector<16x128xf32>
    %6 = tpu.matmul %4, %5, %cst {dimension_numbers = #tpu.dot_dimension_numbers<[1], [0], [0], [1], [0, 0, 1, 1], [], []>} : vector<16x512xbf16>, vector<512x128xbf16>, vector<16x128xf32> -> vector<16x128xf32>
    %7 = arith.addf %3, %6 : vector<16x128xf32>
    %c0_6 = arith.constant 0 : index
    %c0_7 = arith.constant 0 : index
    %8 = vector.load %arg7[%c0_6, %c0_7] : memref<16x128xf32, #tpu.memory_space<vmem>>, vector<16x128xf32>
    tpu.vector_store %arg7[%c0_6, %c0_7], %7 {strides = array<i32>} : memref<16x128xf32, #tpu.memory_space<vmem>>, vector<16x128xf32>,
    %c0_i32_8 = arith.constant 0 : i32
    %9 = arith.cmpi eq, %arg1, %c0_i32_8 : i32
    %10 = arith.extui %9 : i1 to i32
    %c0_i32_9 = arith.constant 0 : i32
    %11 = arith.cmpi ne, %10, %c0_i32_9 : i32
    scf.if %11 {
      %c0_10 = arith.constant 0 : index
      %c0_11 = arith.constant 0 : index
      %12 = vector.load %arg7[%c0_10, %c0_11] : memref<16x128xf32, #tpu.memory_space<vmem>>, vector<16x128xf32>
      %c0_12 = arith.constant 0 : index
      %c0_13 = arith.constant 0 : index
      %13 = vector.load %arg4[%c0_12, %c0_13] : memref<16x1xf32, #tpu.memory_space<vmem>>, vector<16x1xf32>
      %14 = vector.broadcast %13 : vector<16x1xf32> to vector<16x128xf32>
      %15 = arith.addf %12, %14 : vector<16x128xf32>
      %c0_14 = arith.constant 0 : index
      %16 = memref.load %arg5[%c0_14] : memref<1xf32, #tpu.memory_space<smem>>
      %cst_15 = arith.constant 0.000000e+00 : f32
      %17 = vector.broadcast %cst_15 : f32 to vector<16x128xf32>
      %18 = arith.maximumf %15, %17 : vector<16x128xf32>
      %cst_16 = arith.constant 0.000000e+00 : f32
      %19 = vector.broadcast %cst_16 : f32 to vector<16x128xf32>
      %20 = arith.minimumf %15, %19 : vector<16x128xf32>
      %21 = vector.broadcast %16 : f32 to vector<16x128xf32>
      %22 = arith.mulf %21, %20 : vector<16x128xf32>
      %23 = arith.addf %18, %22 : vector<16x128xf32>
      %24 = arith.truncf %23 : vector<16x128xf32> to vector<16x128xbf16>
      %c0_17 = arith.constant 0 : index
      %c0_18 = arith.constant 0 : index
      %25 = vector.load %arg6[%c0_17, %c0_18] : memref<16x128xbf16, #tpu.memory_space<vmem>>, vector<16x128xbf16>
      tpu.vector_store %arg6[%c0_17, %c0_18], %24 {strides = array<i32>} : memref<16x128xbf16, #tpu.memory_space<vmem>>, vector<16x128xbf16>,
    } else {
    }
    return
  }
  func.func @transform_0(%arg0: i32, %arg1: i32) -> (i32, i32) {
    %c0_i32 = arith.constant 0 : i32
    %c0_i32_0 = arith.constant 0 : i32
    return %c0_i32, %arg1 : i32, i32
  }
  func.func @transform_1(%arg0: i32, %arg1: i32) -> (i32, i32) {
    %c0_i32 = arith.constant 0 : i32
    return %arg1, %arg0 : i32, i32
  }
  func.func @transform_2(%arg0: i32, %arg1: i32) -> (i32, i32) {
    %c0_i32 = arith.constant 0 : i32
    %c0_i32_0 = arith.constant 0 : i32
    %c0_i32_1 = arith.constant 0 : i32
    return %c0_i32, %c0_i32_0 : i32, i32
  }
  func.func @transform_3(%arg0: i32, %arg1: i32) -> i32 {
    %c0_i32 = arith.constant 0 : i32
    %c0_i32_0 = arith.constant 0 : i32
    return %c0_i32 : i32
  }
  func.func @transform_4(%arg0: i32, %arg1: i32) -> (i32, i32) {
    %c0_i32 = arith.constant 0 : i32
    %c0_i32_0 = arith.constant 0 : i32
    return %c0_i32, %arg0 : i32, i32
  }
}

module attributes {stable_mosaic.version = 11 : i64} {
  func.func @_mm_bias_prelu_kernel(%arg0: i32, %arg1: i32, %arg2: memref<32x128xbf16, #tpu.memory_space<vmem>>, %arg3: memref<128x128xbf16, #tpu.memory_space<vmem>>, %arg4: memref<32x1xf32, #tpu.memory_space<vmem>>, %arg5: memref<1xf32, #tpu.memory_space<smem>>, %arg6: memref<32x128xbf16, #tpu.memory_space<vmem>>, %arg7: memref<32x128xf32, #tpu.memory_space<vmem>>) attributes {dimension_semantics = [#tpu.dimension_semantics<parallel>, #tpu.dimension_semantics<arbitrary>], iteration_bounds = array<i64: 1, 1>, scalar_prefetch = 0 : i64, scratch_operands = 1 : i64, tpu.core_type = #tpu.core_type<tc>, window_params = [{transform_indices = @transform_0, window_bounds = array<i64: 32, 128>}, {transform_indices = @transform_1, window_bounds = array<i64: 128, 128>}, {pipeline_mode = #tpu.pipeline_mode<synchronous>, transform_indices = @transform_2, window_bounds = array<i64: 32, 1>}, {transform_indices = @transform_3, window_bounds = array<i64: 1>}, {transform_indices = @transform_4, window_bounds = array<i64: 32, 128>}]} {
    %c0_i32 = arith.constant 0 : i32
    %0 = arith.cmpi eq, %arg1, %c0_i32 : i32
    %1 = arith.extui %0 : i1 to i32
    %c0_i32_0 = arith.constant 0 : i32
    %2 = arith.cmpi ne, %1, %c0_i32_0 : i32
    scf.if %2 {
      %cst_10 = arith.constant 0.000000e+00 : f32
      %12 = vector.broadcast %cst_10 : f32 to vector<32x128xf32>
      %c0_11 = arith.constant 0 : index
      %c0_12 = arith.constant 0 : index
      %13 = vector.load %arg7[%c0_11, %c0_12] : memref<32x128xf32, #tpu.memory_space<vmem>>, vector<32x128xf32>
      tpu.vector_store %arg7[%c0_11, %c0_12], %12 {strides = array<i32>} : memref<32x128xf32, #tpu.memory_space<vmem>>, vector<32x128xf32>,
    } else {
    }
    %c0 = arith.constant 0 : index
    %c0_1 = arith.constant 0 : index
    %3 = vector.load %arg7[%c0, %c0_1] : memref<32x128xf32, #tpu.memory_space<vmem>>, vector<32x128xf32>
    %c0_2 = arith.constant 0 : index
    %c0_3 = arith.constant 0 : index
    %4 = vector.load %arg2[%c0_2, %c0_3] : memref<32x128xbf16, #tpu.memory_space<vmem>>, vector<32x128xbf16>
    %c0_4 = arith.constant 0 : index
    %c0_5 = arith.constant 0 : index
    %5 = vector.load %arg3[%c0_4, %c0_5] : memref<128x128xbf16, #tpu.memory_space<vmem>>, vector<128x128xbf16>
    %cst = arith.constant dense<0.000000e+00> : vector<32x128xf32>
    %6 = tpu.matmul %4, %5, %cst {dimension_numbers = #tpu.dot_dimension_numbers<[1], [0], [0], [1], [0, 0, 1, 1], [], []>} : vector<32x128xbf16>, vector<128x128xbf16>, vector<32x128xf32> -> vector<32x128xf32>
    %7 = arith.addf %3, %6 : vector<32x128xf32>
    %c0_6 = arith.constant 0 : index
    %c0_7 = arith.constant 0 : index
    %8 = vector.load %arg7[%c0_6, %c0_7] : memref<32x128xf32, #tpu.memory_space<vmem>>, vector<32x128xf32>
    tpu.vector_store %arg7[%c0_6, %c0_7], %7 {strides = array<i32>} : memref<32x128xf32, #tpu.memory_space<vmem>>, vector<32x128xf32>,
    %c0_i32_8 = arith.constant 0 : i32
    %9 = arith.cmpi eq, %arg1, %c0_i32_8 : i32
    %10 = arith.extui %9 : i1 to i32
    %c0_i32_9 = arith.constant 0 : i32
    %11 = arith.cmpi ne, %10, %c0_i32_9 : i32
    scf.if %11 {
      %c0_10 = arith.constant 0 : index
      %c0_11 = arith.constant 0 : index
      %12 = vector.load %arg7[%c0_10, %c0_11] : memref<32x128xf32, #tpu.memory_space<vmem>>, vector<32x128xf32>
      %c0_12 = arith.constant 0 : index
      %c0_13 = arith.constant 0 : index
      %13 = vector.load %arg4[%c0_12, %c0_13] : memref<32x1xf32, #tpu.memory_space<vmem>>, vector<32x1xf32>
      %14 = vector.broadcast %13 : vector<32x1xf32> to vector<32x128xf32>
      %15 = arith.addf %12, %14 : vector<32x128xf32>
      %c0_14 = arith.constant 0 : index
      %16 = memref.load %arg5[%c0_14] : memref<1xf32, #tpu.memory_space<smem>>
      %cst_15 = arith.constant 0.000000e+00 : f32
      %17 = vector.broadcast %cst_15 : f32 to vector<32x128xf32>
      %18 = arith.maximumf %15, %17 : vector<32x128xf32>
      %cst_16 = arith.constant 0.000000e+00 : f32
      %19 = vector.broadcast %cst_16 : f32 to vector<32x128xf32>
      %20 = arith.minimumf %15, %19 : vector<32x128xf32>
      %21 = vector.broadcast %16 : f32 to vector<32x128xf32>
      %22 = arith.mulf %21, %20 : vector<32x128xf32>
      %23 = arith.addf %18, %22 : vector<32x128xf32>
      %24 = arith.truncf %23 : vector<32x128xf32> to vector<32x128xbf16>
      %c0_17 = arith.constant 0 : index
      %c0_18 = arith.constant 0 : index
      %25 = vector.load %arg6[%c0_17, %c0_18] : memref<32x128xbf16, #tpu.memory_space<vmem>>, vector<32x128xbf16>
      tpu.vector_store %arg6[%c0_17, %c0_18], %24 {strides = array<i32>} : memref<32x128xbf16, #tpu.memory_space<vmem>>, vector<32x128xbf16>,
    } else {
    }
    return
  }
  func.func @transform_0(%arg0: i32, %arg1: i32) -> (i32, i32) {
    %c0_i32 = arith.constant 0 : i32
    %c0_i32_0 = arith.constant 0 : i32
    return %c0_i32, %arg1 : i32, i32
  }
  func.func @transform_1(%arg0: i32, %arg1: i32) -> (i32, i32) {
    %c0_i32 = arith.constant 0 : i32
    return %arg1, %arg0 : i32, i32
  }
  func.func @transform_2(%arg0: i32, %arg1: i32) -> (i32, i32) {
    %c0_i32 = arith.constant 0 : i32
    %c0_i32_0 = arith.constant 0 : i32
    %c0_i32_1 = arith.constant 0 : i32
    return %c0_i32, %c0_i32_0 : i32, i32
  }
  func.func @transform_3(%arg0: i32, %arg1: i32) -> i32 {
    %c0_i32 = arith.constant 0 : i32
    %c0_i32_0 = arith.constant 0 : i32
    return %c0_i32 : i32
  }
  func.func @transform_4(%arg0: i32, %arg1: i32) -> (i32, i32) {
    %c0_i32 = arith.constant 0 : i32
    %c0_i32_0 = arith.constant 0 : i32
    return %c0_i32, %arg0 : i32, i32
  }
}

module attributes {stable_mosaic.version = 11 : i64} {
  func.func @_prelu_sub_kernel(%arg0: i32, %arg1: memref<16x512xbf16, #tpu.memory_space<vmem>>, %arg2: memref<16x512xbf16, #tpu.memory_space<vmem>>, %arg3: memref<1xf32, #tpu.memory_space<smem>>, %arg4: memref<16x512xbf16, #tpu.memory_space<vmem>>) attributes {dimension_semantics = [#tpu.dimension_semantics<parallel>], iteration_bounds = array<i64: 1>, scalar_prefetch = 0 : i64, scratch_operands = 0 : i64, tpu.core_type = #tpu.core_type<tc>, window_params = [{transform_indices = @transform_0, window_bounds = array<i64: 16, 512>}, {transform_indices = @transform_1, window_bounds = array<i64: 16, 512>}, {transform_indices = @transform_2, window_bounds = array<i64: 1>}, {transform_indices = @transform_3, window_bounds = array<i64: 16, 512>}]} {
    %c0 = arith.constant 0 : index
    %0 = memref.load %arg3[%c0] : memref<1xf32, #tpu.memory_space<smem>>
    %c0_0 = arith.constant 0 : index
    %c0_1 = arith.constant 0 : index
    %1 = vector.load %arg1[%c0_0, %c0_1] : memref<16x512xbf16, #tpu.memory_space<vmem>>, vector<16x512xbf16>
    %2 = arith.extf %1 : vector<16x512xbf16> to vector<16x512xf32>
    %c0_2 = arith.constant 0 : index
    %c0_3 = arith.constant 0 : index
    %3 = vector.load %arg2[%c0_2, %c0_3] : memref<16x512xbf16, #tpu.memory_space<vmem>>, vector<16x512xbf16>
    %4 = arith.extf %3 : vector<16x512xbf16> to vector<16x512xf32>
    %cst = arith.constant 0.000000e+00 : f32
    %5 = vector.broadcast %cst : f32 to vector<16x512xf32>
    %6 = arith.maximumf %2, %5 : vector<16x512xf32>
    %cst_4 = arith.constant 0.000000e+00 : f32
    %7 = vector.broadcast %cst_4 : f32 to vector<16x512xf32>
    %8 = arith.minimumf %2, %7 : vector<16x512xf32>
    %9 = vector.broadcast %0 : f32 to vector<16x512xf32>
    %10 = arith.mulf %9, %8 : vector<16x512xf32>
    %11 = arith.addf %6, %10 : vector<16x512xf32>
    %12 = arith.subf %11, %4 : vector<16x512xf32>
    %13 = arith.truncf %12 : vector<16x512xf32> to vector<16x512xbf16>
    %c0_5 = arith.constant 0 : index
    %c0_6 = arith.constant 0 : index
    %14 = vector.load %arg4[%c0_5, %c0_6] : memref<16x512xbf16, #tpu.memory_space<vmem>>, vector<16x512xbf16>
    tpu.vector_store %arg4[%c0_5, %c0_6], %13 {strides = array<i32>} : memref<16x512xbf16, #tpu.memory_space<vmem>>, vector<16x512xbf16>,
    return
  }
  func.func @transform_0(%arg0: i32) -> (i32, i32) {
    %c0_i32 = arith.constant 0 : i32
    %c0_i32_0 = arith.constant 0 : i32
    return %arg0, %c0_i32 : i32, i32
  }
  func.func @transform_1(%arg0: i32) -> (i32, i32) {
    %c0_i32 = arith.constant 0 : i32
    %c0_i32_0 = arith.constant 0 : i32
    return %arg0, %c0_i32 : i32, i32
  }
  func.func @transform_2(%arg0: i32) -> i32 {
    %c0_i32 = arith.constant 0 : i32
    %c0_i32_0 = arith.constant 0 : i32
    return %c0_i32 : i32
  }
  func.func @transform_3(%arg0: i32) -> (i32, i32) {
    %c0_i32 = arith.constant 0 : i32
    %c0_i32_0 = arith.constant 0 : i32
    return %arg0, %c0_i32 : i32, i32
  }
}

module attributes {stable_mosaic.version = 11 : i64} {
  func.func @_mm_bias_prelu_res_kernel(%arg0: i32, %arg1: i32, %arg2: memref<16x512xbf16, #tpu.memory_space<vmem>>, %arg3: memref<512x128xbf16, #tpu.memory_space<vmem>>, %arg4: memref<16x1xf32, #tpu.memory_space<vmem>>, %arg5: memref<1xf32, #tpu.memory_space<smem>>, %arg6: memref<16x128xbf16, #tpu.memory_space<vmem>>, %arg7: memref<16x128xf32, #tpu.memory_space<vmem>>, %arg8: memref<16x128xf32, #tpu.memory_space<vmem>>) attributes {dimension_semantics = [#tpu.dimension_semantics<parallel>, #tpu.dimension_semantics<arbitrary>], iteration_bounds = array<i64: 1, 1>, scalar_prefetch = 0 : i64, scratch_operands = 1 : i64, tpu.core_type = #tpu.core_type<tc>, window_params = [{transform_indices = @transform_0, window_bounds = array<i64: 16, 512>}, {transform_indices = @transform_1, window_bounds = array<i64: 512, 128>}, {pipeline_mode = #tpu.pipeline_mode<synchronous>, transform_indices = @transform_2, window_bounds = array<i64: 16, 1>}, {transform_indices = @transform_3, window_bounds = array<i64: 1>}, {transform_indices = @transform_4, window_bounds = array<i64: 16, 128>}, {transform_indices = @transform_5, window_bounds = array<i64: 16, 128>}]} {
    %c0_i32 = arith.constant 0 : i32
    %0 = arith.cmpi eq, %arg1, %c0_i32 : i32
    %1 = arith.extui %0 : i1 to i32
    %c0_i32_0 = arith.constant 0 : i32
    %2 = arith.cmpi ne, %1, %c0_i32_0 : i32
    scf.if %2 {
      %cst_10 = arith.constant 0.000000e+00 : f32
      %12 = vector.broadcast %cst_10 : f32 to vector<16x128xf32>
      %c0_11 = arith.constant 0 : index
      %c0_12 = arith.constant 0 : index
      %13 = vector.load %arg8[%c0_11, %c0_12] : memref<16x128xf32, #tpu.memory_space<vmem>>, vector<16x128xf32>
      tpu.vector_store %arg8[%c0_11, %c0_12], %12 {strides = array<i32>} : memref<16x128xf32, #tpu.memory_space<vmem>>, vector<16x128xf32>,
    } else {
    }
    %c0 = arith.constant 0 : index
    %c0_1 = arith.constant 0 : index
    %3 = vector.load %arg8[%c0, %c0_1] : memref<16x128xf32, #tpu.memory_space<vmem>>, vector<16x128xf32>
    %c0_2 = arith.constant 0 : index
    %c0_3 = arith.constant 0 : index
    %4 = vector.load %arg2[%c0_2, %c0_3] : memref<16x512xbf16, #tpu.memory_space<vmem>>, vector<16x512xbf16>
    %c0_4 = arith.constant 0 : index
    %c0_5 = arith.constant 0 : index
    %5 = vector.load %arg3[%c0_4, %c0_5] : memref<512x128xbf16, #tpu.memory_space<vmem>>, vector<512x128xbf16>
    %cst = arith.constant dense<0.000000e+00> : vector<16x128xf32>
    %6 = tpu.matmul %4, %5, %cst {dimension_numbers = #tpu.dot_dimension_numbers<[1], [0], [0], [1], [0, 0, 1, 1], [], []>} : vector<16x512xbf16>, vector<512x128xbf16>, vector<16x128xf32> -> vector<16x128xf32>
    %7 = arith.addf %3, %6 : vector<16x128xf32>
    %c0_6 = arith.constant 0 : index
    %c0_7 = arith.constant 0 : index
    %8 = vector.load %arg8[%c0_6, %c0_7] : memref<16x128xf32, #tpu.memory_space<vmem>>, vector<16x128xf32>
    tpu.vector_store %arg8[%c0_6, %c0_7], %7 {strides = array<i32>} : memref<16x128xf32, #tpu.memory_space<vmem>>, vector<16x128xf32>,
    %c0_i32_8 = arith.constant 0 : i32
    %9 = arith.cmpi eq, %arg1, %c0_i32_8 : i32
    %10 = arith.extui %9 : i1 to i32
    %c0_i32_9 = arith.constant 0 : i32
    %11 = arith.cmpi ne, %10, %c0_i32_9 : i32
    scf.if %11 {
      %c0_10 = arith.constant 0 : index
      %c0_11 = arith.constant 0 : index
      %12 = vector.load %arg8[%c0_10, %c0_11] : memref<16x128xf32, #tpu.memory_space<vmem>>, vector<16x128xf32>
      %c0_12 = arith.constant 0 : index
      %c0_13 = arith.constant 0 : index
      %13 = vector.load %arg4[%c0_12, %c0_13] : memref<16x1xf32, #tpu.memory_space<vmem>>, vector<16x1xf32>
      %14 = vector.broadcast %13 : vector<16x1xf32> to vector<16x128xf32>
      %15 = arith.addf %12, %14 : vector<16x128xf32>
      %c0_14 = arith.constant 0 : index
      %16 = memref.load %arg5[%c0_14] : memref<1xf32, #tpu.memory_space<smem>>
      %cst_15 = arith.constant 0.000000e+00 : f32
      %17 = vector.broadcast %cst_15 : f32 to vector<16x128xf32>
      %18 = arith.maximumf %15, %17 : vector<16x128xf32>
      %cst_16 = arith.constant 0.000000e+00 : f32
      %19 = vector.broadcast %cst_16 : f32 to vector<16x128xf32>
      %20 = arith.minimumf %15, %19 : vector<16x128xf32>
      %21 = vector.broadcast %16 : f32 to vector<16x128xf32>
      %22 = arith.mulf %21, %20 : vector<16x128xf32>
      %23 = arith.addf %18, %22 : vector<16x128xf32>
      %c0_17 = arith.constant 0 : index
      %c0_18 = arith.constant 0 : index
      %24 = vector.load %arg6[%c0_17, %c0_18] : memref<16x128xbf16, #tpu.memory_space<vmem>>, vector<16x128xbf16>
      %25 = arith.extf %24 : vector<16x128xbf16> to vector<16x128xf32>
      %26 = arith.addf %23, %25 : vector<16x128xf32>
      %c0_19 = arith.constant 0 : index
      %c0_20 = arith.constant 0 : index
      %27 = vector.load %arg7[%c0_19, %c0_20] : memref<16x128xf32, #tpu.memory_space<vmem>>, vector<16x128xf32>
      tpu.vector_store %arg7[%c0_19, %c0_20], %26 {strides = array<i32>} : memref<16x128xf32, #tpu.memory_space<vmem>>, vector<16x128xf32>,
    } else {
    }
    return
  }
  func.func @transform_0(%arg0: i32, %arg1: i32) -> (i32, i32) {
    %c0_i32 = arith.constant 0 : i32
    %c0_i32_0 = arith.constant 0 : i32
    return %c0_i32, %arg1 : i32, i32
  }
  func.func @transform_1(%arg0: i32, %arg1: i32) -> (i32, i32) {
    %c0_i32 = arith.constant 0 : i32
    return %arg1, %arg0 : i32, i32
  }
  func.func @transform_2(%arg0: i32, %arg1: i32) -> (i32, i32) {
    %c0_i32 = arith.constant 0 : i32
    %c0_i32_0 = arith.constant 0 : i32
    %c0_i32_1 = arith.constant 0 : i32
    return %c0_i32, %c0_i32_0 : i32, i32
  }
  func.func @transform_3(%arg0: i32, %arg1: i32) -> i32 {
    %c0_i32 = arith.constant 0 : i32
    %c0_i32_0 = arith.constant 0 : i32
    return %c0_i32 : i32
  }
  func.func @transform_4(%arg0: i32, %arg1: i32) -> (i32, i32) {
    %c0_i32 = arith.constant 0 : i32
    %c0_i32_0 = arith.constant 0 : i32
    return %c0_i32, %arg0 : i32, i32
  }
  func.func @transform_5(%arg0: i32, %arg1: i32) -> (i32, i32) {
    %c0_i32 = arith.constant 0 : i32
    %c0_i32_0 = arith.constant 0 : i32
    return %c0_i32, %arg0 : i32, i32
  }
}

</mosaic_0001>

<llo_original>
// kernel: down_block_pix_forward.5
$region0: #{down_block_pix_forward.5}
  #allocation0 [shape = 'u32[]', space=smem, size = 0x4, offset = 0x4, fixed_abs, tag = 'smem constant byte address 0x4 - core index']
  #allocation1 [shape = 'u32[144,128]{1,0:T(1,128)}', space=vmem, size = 0x12000, scoped, tag = 'internal scratch']
  #allocation2 [shape = 'f32[16,128]{1,0:T(8,128)}', space=vmem, size = 0x2000, scoped, tag = 'scratch operand']
  #allocation3 [shape = 'f32[1]{0:T(128)S(6)}', space=smem, size = 0x200, scoped, tag = 'scoped memory for down_block_pix_forward.5']
  %s0 = inlined_call_operand.vmem [shape: bf16[16,512], index: 0, kind: input, shape index: {}]
  %s1 = inlined_call_operand.vmem [shape: bf16[512,128], index: 1, kind: input, shape index: {}]
  %s2 = inlined_call_operand.vmem [shape: f32[16,1], index: 2, kind: input, shape index: {}]
  %s3 = inlined_call_operand.<no memory space> [shape: f32[1], index: 3, kind: input, shape index: {}]
  %s4 = inlined_call_operand.vmem [shape: bf16[16,128], index: 4, kind: output, shape index: {}]
  %s5 = sld [smem:[#allocation0]]
  $region34: #{down_block_pix_forward.5} parent=0
    _
  %s7 = ssub.s32 1, %s5
  %s8 = scalar_select 0, %s7, %s5
  %9 = sst [smem:[#allocation3]] %s3
  // Predicated region
  $region2: #{down_block_pix_forward.5} parent=0 // pred_check
    _
  $region3: #{down_block_pix_forward.5} parent=0 // pred_check_branch
    %11 = sbr.rel (0) target = $region5
  $region4: #{down_block_pix_forward.5} parent=0 // pred_region
    _
  $region5: #{down_block_pix_forward.5} parent=0 // pred_fallthru
    _
  // Predicated region
  $region6: #{down_block_pix_forward.5} parent=0 // pred_check
    _
  $region7: #{down_block_pix_forward.5} parent=0 // pred_check_branch
    %13 = sbr.rel (0) target = $region9
  $region8: #{down_block_pix_forward.5} parent=0 // pred_region
    _
  $region9: #{down_block_pix_forward.5} parent=0 // pred_fallthru
    _
  // Predicated region
  $region10: #{down_block_pix_forward.5} parent=0 // pred_check
    _
  $region11: #{down_block_pix_forward.5} parent=0 // pred_check_branch
    %15 = sbr.rel (0) target = $region13
  $region12: #{down_block_pix_forward.5} parent=0 // pred_region
    _
  $region13: #{down_block_pix_forward.5} parent=0 // pred_fallthru
    _
  // Predicated region
  $region14: #{down_block_pix_forward.5} parent=0 // pred_check
    _
  $region15: #{down_block_pix_forward.5} parent=0 // pred_check_branch
    %17 = sbr.rel (0) target = $region17
  $region16: #{down_block_pix_forward.5} parent=0 // pred_region
    _
  $region17: #{down_block_pix_forward.5} parent=0 // pred_fallthru
    _
  %p19 = scmp.eq.s32.totalorder 0, 0
  // Predicated region
  $region18: #{down_block_pix_forward.5} parent=0 // pred_check
    %p20 = pneg %p19
  $region19: #{down_block_pix_forward.5} parent=0 // pred_check_branch
    %22 = sbr.rel (%p20) target = $region21
  $region20: #{down_block_pix_forward.5} parent=0 // pred_region
    %23 = vst [vmem:[#allocation2] sm:$0xff] 0.0
    %24 = vst [vmem:[#allocation2 + $0x8] sm:$0xff] 0.0
  $region21: #{down_block_pix_forward.5} parent=0 // pred_fallthru
    _
  %v25 = vld [vmem:[#allocation2] sm:$0xff]
  %v26 = vld [vmem:[#allocation2 + $0x8] sm:$0xff]
  %v27 = vld [vmem:[%s0] sm:$0xff]
  %v28 = vld [vmem:[%s0 + $0x8] sm:$0xff]
  %v29 = vld [vmem:[%s0 + $0x10] sm:$0xff]
  %v30 = vld [vmem:[%s0 + $0x18] sm:$0xff]
  %v31 = vld [vmem:[%s1] sm:$0xf]
  %v32 = vld [vmem:[%s1 + $0x4] sm:$0xf]
  %v33 = vld [vmem:[%s1 + $0x8] sm:$0xf]
  %v34 = vld [vmem:[%s1 + $0xc] sm:$0xf]
  %v35 = vld [vmem:[%s1 + $0x10] sm:$0xf]
  %v36 = vld [vmem:[%s1 + $0x14] sm:$0xf]
  %v37 = vld [vmem:[%s1 + $0x18] sm:$0xf]
  %v38 = vld [vmem:[%s1 + $0x1c] sm:$0xf]
  %v39 = vld [vmem:[%s1 + $0x20] sm:$0xf]
  %v40 = vld [vmem:[%s1 + $0x24] sm:$0xf]
  %v41 = vld [vmem:[%s1 + $0x28] sm:$0xf]
  %v42 = vld [vmem:[%s1 + $0x2c] sm:$0xf]
  %v43 = vld [vmem:[%s1 + $0x30] sm:$0xf]
  %v44 = vld [vmem:[%s1 + $0x34] sm:$0xf]
  %v45 = vld [vmem:[%s1 + $0x38] sm:$0xf]
  %v46 = vld [vmem:[%s1 + $0x3c] sm:$0xf]
  %v47 = vld [vmem:[%s1 + $0x40] sm:$0xf]
  %v48 = vld [vmem:[%s1 + $0x44] sm:$0xf]
  %v49 = vld [vmem:[%s1 + $0x48] sm:$0xf]
  %v50 = vld [vmem:[%s1 + $0x4c] sm:$0xf]
  %v51 = vld [vmem:[%s1 + $0x50] sm:$0xf]
  %v52 = vld [vmem:[%s1 + $0x54] sm:$0xf]
  %v53 = vld [vmem:[%s1 + $0x58] sm:$0xf]
  %v54 = vld [vmem:[%s1 + $0x5c] sm:$0xf]
  %v55 = vld [vmem:[%s1 + $0x60] sm:$0xf]
  %v56 = vld [vmem:[%s1 + $0x64] sm:$0xf]
  %v57 = vld [vmem:[%s1 + $0x68] sm:$0xf]
  %v58 = vld [vmem:[%s1 + $0x6c] sm:$0xf]
  %v59 = vld [vmem:[%s1 + $0x70] sm:$0xf]
  %v60 = vld [vmem:[%s1 + $0x74] sm:$0xf]
  %v61 = vld [vmem:[%s1 + $0x78] sm:$0xf]
  %v62 = vld [vmem:[%s1 + $0x7c] sm:$0xf]
  %v63 = vld [vmem:[%s1 + $0x80] sm:$0xf]
  %v64 = vld [vmem:[%s1 + $0x84] sm:$0xf]
  %v65 = vld [vmem:[%s1 + $0x88] sm:$0xf]
  %v66 = vld [vmem:[%s1 + $0x8c] sm:$0xf]
  %v67 = vld [vmem:[%s1 + $0x90] sm:$0xf]
  %v68 = vld [vmem:[%s1 + $0x94] sm:$0xf]
  %v69 = vld [vmem:[%s1 + $0x98] sm:$0xf]
  %v70 = vld [vmem:[%s1 + $0x9c] sm:$0xf]
  %v71 = vld [vmem:[%s1 + $0xa0] sm:$0xf]
  %v72 = vld [vmem:[%s1 + $0xa4] sm:$0xf]
  %v73 = vld [vmem:[%s1 + $0xa8] sm:$0xf]
  %v74 = vld [vmem:[%s1 + $0xac] sm:$0xf]
  %v75 = vld [vmem:[%s1 + $0xb0] sm:$0xf]
  %v76 = vld [vmem:[%s1 + $0xb4] sm:$0xf]
  %v77 = vld [vmem:[%s1 + $0xb8] sm:$0xf]
  %v78 = vld [vmem:[%s1 + $0xbc] sm:$0xf]
  %v79 = vld [vmem:[%s1 + $0xc0] sm:$0xf]
  %v80 = vld [vmem:[%s1 + $0xc4] sm:$0xf]
  %v81 = vld [vmem:[%s1 + $0xc8] sm:$0xf]
  %v82 = vld [vmem:[%s1 + $0xcc] sm:$0xf]
  %v83 = vld [vmem:[%s1 + $0xd0] sm:$0xf]
  %v84 = vld [vmem:[%s1 + $0xd4] sm:$0xf]
  %v85 = vld [vmem:[%s1 + $0xd8] sm:$0xf]
  %v86 = vld [vmem:[%s1 + $0xdc] sm:$0xf]
  %v87 = vld [vmem:[%s1 + $0xe0] sm:$0xf]
  %v88 = vld [vmem:[%s1 + $0xe4] sm:$0xf]
  %v89 = vld [vmem:[%s1 + $0xe8] sm:$0xf]
  %v90 = vld [vmem:[%s1 + $0xec] sm:$0xf]
  %v91 = vld [vmem:[%s1 + $0xf0] sm:$0xf]
  %v92 = vld [vmem:[%s1 + $0xf4] sm:$0xf]
  %v93 = vld [vmem:[%s1 + $0xf8] sm:$0xf]
  %v94 = vld [vmem:[%s1 + $0xfc] sm:$0xf]
  %v99 = vunpack.c.l.b16 %v27
  %v100 = vunpack.c.h.b16 %v27
  %v101 = vunpack.c.l.b16 %v28
  %v102 = vunpack.c.h.b16 %v28
  %v103 = vunpack.c.l.b16 %v29
  %v104 = vunpack.c.h.b16 %v29
  %v105 = vunpack.c.l.b16 %v30
  %v106 = vunpack.c.h.b16 %v30
  %v107 = vpack.c.b16 %v103, %v99
  %v108 = vpack.c.b16 %v104, %v100
  %v109 = vpack.c.b16 %v105, %v101
  %v110 = vpack.c.b16 %v106, %v102
  %v179 = vunpack.c.l.b16 %v31
  %v180 = vunpack.c.l.b16 %v32
  %v181 = vunpack.c.l.b16 %v33
  %v182 = vunpack.c.l.b16 %v34
  %v183 = vunpack.c.l.b16 %v35
  %v184 = vunpack.c.l.b16 %v36
  %v185 = vunpack.c.l.b16 %v37
  %v186 = vunpack.c.l.b16 %v38
  %v187 = vunpack.c.l.b16 %v39
  %v188 = vunpack.c.l.b16 %v40
  %v189 = vunpack.c.l.b16 %v41
  %v190 = vunpack.c.l.b16 %v42
  %v191 = vunpack.c.l.b16 %v43
  %v192 = vunpack.c.l.b16 %v44
  %v193 = vunpack.c.l.b16 %v45
  %v194 = vunpack.c.l.b16 %v46
  %v195 = vunpack.c.l.b16 %v47
  %v196 = vunpack.c.l.b16 %v48
  %v197 = vunpack.c.l.b16 %v49
  %v198 = vunpack.c.l.b16 %v50
  %v199 = vunpack.c.l.b16 %v51
  %v200 = vunpack.c.l.b16 %v52
  %v201 = vunpack.c.l.b16 %v53
  %v202 = vunpack.c.l.b16 %v54
  %v203 = vunpack.c.l.b16 %v55
  %v204 = vunpack.c.l.b16 %v56
  %v205 = vunpack.c.l.b16 %v57
  %v206 = vunpack.c.l.b16 %v58
  %v207 = vunpack.c.l.b16 %v59
  %v208 = vunpack.c.l.b16 %v60
  %v209 = vunpack.c.l.b16 %v61
  %v210 = vunpack.c.l.b16 %v62
  %v211 = vunpack.c.l.b16 %v63
  %v212 = vunpack.c.l.b16 %v64
  %v213 = vunpack.c.l.b16 %v65
  %v214 = vunpack.c.l.b16 %v66
  %v215 = vunpack.c.l.b16 %v67
  %v216 = vunpack.c.l.b16 %v68
  %v217 = vunpack.c.l.b16 %v69
  %v218 = vunpack.c.l.b16 %v70
  %v219 = vunpack.c.l.b16 %v71
  %v220 = vunpack.c.l.b16 %v72
  %v221 = vunpack.c.l.b16 %v73
  %v222 = vunpack.c.l.b16 %v74
  %v223 = vunpack.c.l.b16 %v75
  %v224 = vunpack.c.l.b16 %v76
  %v225 = vunpack.c.l.b16 %v77
  %v226 = vunpack.c.l.b16 %v78
  %v227 = vunpack.c.l.b16 %v79
  %v228 = vunpack.c.l.b16 %v80
  %v229 = vunpack.c.l.b16 %v81
  %v230 = vunpack.c.l.b16 %v82
  %v231 = vunpack.c.l.b16 %v83
  %v232 = vunpack.c.l.b16 %v84
  %v233 = vunpack.c.l.b16 %v85
  %v234 = vunpack.c.l.b16 %v86
  %v235 = vunpack.c.l.b16 %v87
  %v236 = vunpack.c.l.b16 %v88
  %v237 = vunpack.c.l.b16 %v89
  %v238 = vunpack.c.l.b16 %v90
  %v239 = vunpack.c.l.b16 %v91
  %v240 = vunpack.c.l.b16 %v92
  %v241 = vunpack.c.l.b16 %v93
  %v242 = vunpack.c.l.b16 %v94
  %v243 = vpack.c.b16 %v180, %v179
  %v244 = vpack.c.b16 %v182, %v181
  %v245 = vpack.c.b16 %v184, %v183
  %v246 = vpack.c.b16 %v186, %v185
  %v247 = vpack.c.b16 %v188, %v187
  %v248 = vpack.c.b16 %v190, %v189
  %v249 = vpack.c.b16 %v192, %v191
  %v250 = vpack.c.b16 %v194, %v193
  %v251 = vpack.c.b16 %v196, %v195
  %v252 = vpack.c.b16 %v198, %v197
  %v253 = vpack.c.b16 %v200, %v199
  %v254 = vpack.c.b16 %v202, %v201
  %v255 = vpack.c.b16 %v204, %v203
  %v256 = vpack.c.b16 %v206, %v205
  %v257 = vpack.c.b16 %v208, %v207
  %v258 = vpack.c.b16 %v210, %v209
  %v259 = vpack.c.b16 %v212, %v211
  %v260 = vpack.c.b16 %v214, %v213
  %v261 = vpack.c.b16 %v216, %v215
  %v262 = vpack.c.b16 %v218, %v217
  %v263 = vpack.c.b16 %v220, %v219
  %v264 = vpack.c.b16 %v222, %v221
  %v265 = vpack.c.b16 %v224, %v223
  %v266 = vpack.c.b16 %v226, %v225
  %v267 = vpack.c.b16 %v228, %v227
  %v268 = vpack.c.b16 %v230, %v229
  %v269 = vpack.c.b16 %v232, %v231
  %v270 = vpack.c.b16 %v234, %v233
  %v271 = vpack.c.b16 %v236, %v235
  %v272 = vpack.c.b16 %v238, %v237
  %v273 = vpack.c.b16 %v240, %v239
  %v274 = vpack.c.b16 %v242, %v241
  %307 = vmatprep.subr.bf16.mxu0 0
  %308 = vmatpush1.bf16.msra.mxu0 %v243
  %309 = vmatprep.subr.bf16.mxu0 0
  %310 = vmatpush1.bf16.msra.mxu0 %v244
  %311 = vmatprep.subr.bf16.mxu0 0
  %312 = vmatpush1.bf16.msra.mxu0 %v245
  %313 = vmatprep.subr.bf16.mxu0 0
  %314 = vmatpush1.bf16.msra.mxu0 %v246
  %315 = vmatprep.subr.bf16.mxu0 0
  %316 = vmatpush1.bf16.msra.mxu0 %v247
  %317 = vmatprep.subr.bf16.mxu0 0
  %318 = vmatpush1.bf16.msra.mxu0 %v248
  %319 = vmatprep.subr.bf16.mxu0 0
  %320 = vmatpush1.bf16.msra.mxu0 %v249
  %321 = vmatprep.subr.bf16.mxu0 0
  %322 = vmatpush1.bf16.msra.mxu0 %v250
  %323 = vmatprep.subr.bf16.mxu0 0
  %324 = vmatpush1.bf16.msra.mxu0 %v251
  %325 = vmatprep.subr.bf16.mxu0 0
  %326 = vmatpush1.bf16.msra.mxu0 %v252
  %327 = vmatprep.subr.bf16.mxu0 0
  %328 = vmatpush1.bf16.msra.mxu0 %v253
  %329 = vmatprep.subr.bf16.mxu0 0
  %330 = vmatpush1.bf16.msra.mxu0 %v254
  %331 = vmatprep.subr.bf16.mxu0 0
  %332 = vmatpush1.bf16.msra.mxu0 %v255
  %333 = vmatprep.subr.bf16.mxu0 0
  %334 = vmatpush1.bf16.msra.mxu0 %v256
  %335 = vmatprep.subr.bf16.mxu0 0
  %336 = vmatpush1.bf16.msra.mxu0 %v257
  %337 = vmatprep.subr.bf16.mxu0 0
  %338 = vmatpush1.bf16.msra.mxu0 %v258
  %339 = vmatprep.mubr.bf16.mxu0 %v108
  %340 = vmatmul.mubr.bf16.gmra.mrb[0].mxu0 %v107
  %v341 = vpop.f32.mrb[0].mxu0
  %v342 = vadd.f32 0.0, %v341
  %v343 = vpop.f32.mrb[0].mxu0
  %v344 = vpop.f32.mrb[0].mxu0
  %v345 = vadd.f32 0.0, %v344
  %v346 = vpop.f32.mrb[0].mxu0
  %347 = vdwg.mxu0
  %348 = vmatprep.subr.bf16.mxu0 0
  %349 = vmatpush1.bf16.msra.mxu0 %v259
  %350 = vmatprep.subr.bf16.mxu0 0
  %351 = vmatpush1.bf16.msra.mxu0 %v260
  %352 = vmatprep.subr.bf16.mxu0 0
  %353 = vmatpush1.bf16.msra.mxu0 %v261
  %354 = vmatprep.subr.bf16.mxu0 0
  %355 = vmatpush1.bf16.msra.mxu0 %v262
  %356 = vmatprep.subr.bf16.mxu0 0
  %357 = vmatpush1.bf16.msra.mxu0 %v263
  %358 = vmatprep.subr.bf16.mxu0 0
  %359 = vmatpush1.bf16.msra.mxu0 %v264
  %360 = vmatprep.subr.bf16.mxu0 0
  %361 = vmatpush1.bf16.msra.mxu0 %v265
  %362 = vmatprep.subr.bf16.mxu0 0
  %363 = vmatpush1.bf16.msra.mxu0 %v266
  %364 = vmatprep.subr.bf16.mxu0 0
  %365 = vmatpush1.bf16.msra.mxu0 %v267
  %366 = vmatprep.subr.bf16.mxu0 0
  %367 = vmatpush1.bf16.msra.mxu0 %v268
  %368 = vmatprep.subr.bf16.mxu0 0
  %369 = vmatpush1.bf16.msra.mxu0 %v269
  %370 = vmatprep.subr.bf16.mxu0 0
  %371 = vmatpush1.bf16.msra.mxu0 %v270
  %372 = vmatprep.subr.bf16.mxu0 0
  %373 = vmatpush1.bf16.msra.mxu0 %v271
  %374 = vmatprep.subr.bf16.mxu0 0
  %375 = vmatpush1.bf16.msra.mxu0 %v272
  %376 = vmatprep.subr.bf16.mxu0 0
  %377 = vmatpush1.bf16.msra.mxu0 %v273
  %378 = vmatprep.subr.bf16.mxu0 0
  %379 = vmatpush1.bf16.msra.mxu0 %v274
  %380 = vmatprep.mubr.bf16.mxu0 %v110
  %381 = vmatmul.mubr.bf16.gmra.mrb[0].mxu0 %v109
  %v382 = vpop.f32.mrb[0].mxu0
  %v383 = vadd.f32 %v342, %v382
  %v384 = vpop.f32.mrb[0].mxu0
  %v385 = vpop.f32.mrb[0].mxu0
  %v386 = vadd.f32 %v345, %v385
  %v387 = vpop.f32.mrb[0].mxu0
  %388 = vdwg.mxu0
  %v389 = vadd.f32 %v25, %v383
  %v390 = vadd.f32 %v26, %v386
  %391 = vst [vmem:[#allocation2] sm:$0xff] %v389
  %392 = vst [vmem:[#allocation2 + $0x8] sm:$0xff] %v390
  // Predicated region
  $region22: #{down_block_pix_forward.5} parent=0 // pred_check
    %p393 = pneg %p19
  $region23: #{down_block_pix_forward.5} parent=0 // pred_check_branch
    %395 = sbr.rel (%p393) target = $region25
  $region24: #{down_block_pix_forward.5} parent=0 // pred_region
    %v396 = vld [vmem:[#allocation2] sm:$0xff]
    %v397 = vld [vmem:[#allocation2 + $0x8] sm:$0xff]
    %v398 = vld [vmem:[%s2] sm:$0xff]
    %v399 = vld [vmem:[%s2 + $0x8] sm:$0xff]
    %401 = vset.pattern.permute.xlu0 0
    %402 = vperm.xlu0 %401, %v398
    %v403 = vpop.permute.xlu0 %402
    %406 = vset.pattern.permute.xlu0 0
    %407 = vperm.xlu0 %406, %v399
    %v408 = vpop.permute.xlu0 %407
    %v410 = vadd.f32 %v396, %v403
    %v411 = vadd.f32 %v397, %v408
    %s412 = sld [smem:[#allocation3]]
    %v413 = vmax.f32 %v410, 0.0
    %v414 = vmax.f32 %v411, 0.0
    %v415 = vmin.f32 %v410, 0.0
    %v416 = vmin.f32 %v411, 0.0
    %v417 = vstv %s412
    %v418 = vmul.f32 %v417, %v415
    %v419 = vmul.f32 %v417, %v416
    %v420 = vadd.f32 %v413, %v418
    %v421 = vadd.f32 %v414, %v419
    %v422 = vpack.c.bf16 %v421, %v420
    %v424 = vunpack.c.l.b16 %v422
    %v425 = vunpack.c.h.b16 %v422
    %v426 = vpack.c.b16 %v424, %v424
    %v427 = vpack.c.b16 %v425, %v425
    %430 = vst [vmem:[%s4] sm:$0xf] %v426
    %431 = vst [vmem:[%s4 + $0x4] sm:$0xf] %v427
  $region25: #{down_block_pix_forward.5} parent=0 // pred_fallthru
    _
  // Predicated region
  $region26: #{down_block_pix_forward.5} parent=0 // pred_check
    _
  $region27: #{down_block_pix_forward.5} parent=0 // pred_check_branch
    %433 = sbr.rel (0) target = $region29
  $region28: #{down_block_pix_forward.5} parent=0 // pred_region
    _
  $region29: #{down_block_pix_forward.5} parent=0 // pred_fallthru
    _
  // Predicated region
  $region30: #{down_block_pix_forward.5} parent=0 // pred_check
    _
  $region31: #{down_block_pix_forward.5} parent=0 // pred_check_branch
    %435 = sbr.rel (0) target = $region33
  $region32: #{down_block_pix_forward.5} parent=0 // pred_region
    _
  $region33: #{down_block_pix_forward.5} parent=0 // pred_fallthru
    _

// kernel: down_block_pix_forward.6
$region0: #{down_block_pix_forward.6}
  #allocation0 [shape = 'u32[]', space=smem, size = 0x4, offset = 0x4, fixed_abs, tag = 'smem constant byte address 0x4 - core index']
  #allocation1 [shape = 'u32[144,128]{1,0:T(1,128)}', space=vmem, size = 0x12000, scoped, tag = 'internal scratch']
  #allocation2 [shape = 'f32[32,128]{1,0:T(8,128)}', space=vmem, size = 0x4000, scoped, tag = 'scratch operand']
  #allocation3 [shape = 'f32[1]{0:T(128)S(6)}', space=smem, size = 0x200, scoped, tag = 'scoped memory for down_block_pix_forward.6']
  %s0 = inlined_call_operand.vmem [shape: bf16[32,128], index: 0, kind: input, shape index: {}]
  %s1 = inlined_call_operand.vmem [shape: bf16[128,128], index: 1, kind: input, shape index: {}]
  %s2 = inlined_call_operand.vmem [shape: f32[32,1], index: 2, kind: input, shape index: {}]
  %s3 = inlined_call_operand.<no memory space> [shape: f32[1], index: 3, kind: input, shape index: {}]
  %s4 = inlined_call_operand.vmem [shape: bf16[32,128], index: 4, kind: output, shape index: {}]
  %s5 = sld [smem:[#allocation0]]
  $region34: #{down_block_pix_forward.6} parent=0
    _
  %s7 = ssub.s32 1, %s5
  %s8 = scalar_select 0, %s7, %s5
  %9 = sst [smem:[#allocation3]] %s3
  // Predicated region
  $region2: #{down_block_pix_forward.6} parent=0 // pred_check
    _
  $region3: #{down_block_pix_forward.6} parent=0 // pred_check_branch
    %11 = sbr.rel (0) target = $region5
  $region4: #{down_block_pix_forward.6} parent=0 // pred_region
    _
  $region5: #{down_block_pix_forward.6} parent=0 // pred_fallthru
    _
  // Predicated region
  $region6: #{down_block_pix_forward.6} parent=0 // pred_check
    _
  $region7: #{down_block_pix_forward.6} parent=0 // pred_check_branch
    %13 = sbr.rel (0) target = $region9
  $region8: #{down_block_pix_forward.6} parent=0 // pred_region
    _
  $region9: #{down_block_pix_forward.6} parent=0 // pred_fallthru
    _
  // Predicated region
  $region10: #{down_block_pix_forward.6} parent=0 // pred_check
    _
  $region11: #{down_block_pix_forward.6} parent=0 // pred_check_branch
    %15 = sbr.rel (0) target = $region13
  $region12: #{down_block_pix_forward.6} parent=0 // pred_region
    _
  $region13: #{down_block_pix_forward.6} parent=0 // pred_fallthru
    _
  // Predicated region
  $region14: #{down_block_pix_forward.6} parent=0 // pred_check
    _
  $region15: #{down_block_pix_forward.6} parent=0 // pred_check_branch
    %17 = sbr.rel (0) target = $region17
  $region16: #{down_block_pix_forward.6} parent=0 // pred_region
    _
  $region17: #{down_block_pix_forward.6} parent=0 // pred_fallthru
    _
  %p19 = scmp.eq.s32.totalorder 0, 0
  // Predicated region
  $region18: #{down_block_pix_forward.6} parent=0 // pred_check
    %p20 = pneg %p19
  $region19: #{down_block_pix_forward.6} parent=0 // pred_check_branch
    %22 = sbr.rel (%p20) target = $region21
  $region20: #{down_block_pix_forward.6} parent=0 // pred_region
    %23 = vst [vmem:[#allocation2] sm:$0xff] 0.0
    %24 = vst [vmem:[#allocation2 + $0x8] sm:$0xff] 0.0
    %25 = vst [vmem:[#allocation2 + $0x10] sm:$0xff] 0.0
    %26 = vst [vmem:[#allocation2 + $0x18] sm:$0xff] 0.0
  $region21: #{down_block_pix_forward.6} parent=0 // pred_fallthru
    _
  %v27 = vld [vmem:[#allocation2] sm:$0xff]
  %v28 = vld [vmem:[#allocation2 + $0x8] sm:$0xff]
  %v29 = vld [vmem:[#allocation2 + $0x10] sm:$0xff]
  %v30 = vld [vmem:[#allocation2 + $0x18] sm:$0xff]
  %v31 = vld [vmem:[%s0] sm:$0xf]
  %v32 = vld [vmem:[%s0 + $0x4] sm:$0xf]
  %v33 = vld [vmem:[%s0 + $0x8] sm:$0xf]
  %v34 = vld [vmem:[%s0 + $0xc] sm:$0xf]
  %v35 = vld [vmem:[%s1] sm:$0xf]
  %v36 = vld [vmem:[%s1 + $0x4] sm:$0xf]
  %v37 = vld [vmem:[%s1 + $0x8] sm:$0xf]
  %v38 = vld [vmem:[%s1 + $0xc] sm:$0xf]
  %v39 = vld [vmem:[%s1 + $0x10] sm:$0xf]
  %v40 = vld [vmem:[%s1 + $0x14] sm:$0xf]
  %v41 = vld [vmem:[%s1 + $0x18] sm:$0xf]
  %v42 = vld [vmem:[%s1 + $0x1c] sm:$0xf]
  %v43 = vld [vmem:[%s1 + $0x20] sm:$0xf]
  %v44 = vld [vmem:[%s1 + $0x24] sm:$0xf]
  %v45 = vld [vmem:[%s1 + $0x28] sm:$0xf]
  %v46 = vld [vmem:[%s1 + $0x2c] sm:$0xf]
  %v47 = vld [vmem:[%s1 + $0x30] sm:$0xf]
  %v48 = vld [vmem:[%s1 + $0x34] sm:$0xf]
  %v49 = vld [vmem:[%s1 + $0x38] sm:$0xf]
  %v50 = vld [vmem:[%s1 + $0x3c] sm:$0xf]
  %v55 = vunpack.c.l.b16 %v31
  %v56 = vunpack.c.l.b16 %v32
  %v57 = vunpack.c.l.b16 %v33
  %v58 = vunpack.c.l.b16 %v34
  %v59 = vpack.c.b16 %v56, %v55
  %v60 = vpack.c.b16 %v58, %v57
  %v79 = vunpack.c.l.b16 %v35
  %v80 = vunpack.c.l.b16 %v36
  %v81 = vunpack.c.l.b16 %v37
  %v82 = vunpack.c.l.b16 %v38
  %v83 = vunpack.c.l.b16 %v39
  %v84 = vunpack.c.l.b16 %v40
  %v85 = vunpack.c.l.b16 %v41
  %v86 = vunpack.c.l.b16 %v42
  %v87 = vunpack.c.l.b16 %v43
  %v88 = vunpack.c.l.b16 %v44
  %v89 = vunpack.c.l.b16 %v45
  %v90 = vunpack.c.l.b16 %v46
  %v91 = vunpack.c.l.b16 %v47
  %v92 = vunpack.c.l.b16 %v48
  %v93 = vunpack.c.l.b16 %v49
  %v94 = vunpack.c.l.b16 %v50
  %v95 = vpack.c.b16 %v80, %v79
  %v96 = vpack.c.b16 %v82, %v81
  %v97 = vpack.c.b16 %v84, %v83
  %v98 = vpack.c.b16 %v86, %v85
  %v99 = vpack.c.b16 %v88, %v87
  %v100 = vpack.c.b16 %v90, %v89
  %v101 = vpack.c.b16 %v92, %v91
  %v102 = vpack.c.b16 %v94, %v93
  %111 = vmatprep.subr.bf16.mxu0 0
  %112 = vmatpush1.bf16.msra.mxu0 %v95
  %113 = vmatprep.subr.bf16.mxu0 0
  %114 = vmatpush1.bf16.msra.mxu0 %v96
  %115 = vmatprep.subr.bf16.mxu0 0
  %116 = vmatpush1.bf16.msra.mxu0 %v97
  %117 = vmatprep.subr.bf16.mxu0 0
  %118 = vmatpush1.bf16.msra.mxu0 %v98
  %119 = vmatprep.subr.bf16.mxu0 0
  %120 = vmatpush1.bf16.msra.mxu0 %v99
  %121 = vmatprep.subr.bf16.mxu0 0
  %122 = vmatpush1.bf16.msra.mxu0 %v100
  %123 = vmatprep.subr.bf16.mxu0 0
  %124 = vmatpush1.bf16.msra.mxu0 %v101
  %125 = vmatprep.subr.bf16.mxu0 0
  %126 = vmatpush1.bf16.msra.mxu0 %v102
  %127 = vmatprep.subr.bf16.mxu0 0
  %128 = vmatpush1.bf16.msra.mxu0 0
  %129 = vmatprep.subr.bf16.mxu0 0
  %130 = vmatpush1.bf16.msra.mxu0 0
  %131 = vmatprep.subr.bf16.mxu0 0
  %132 = vmatpush1.bf16.msra.mxu0 0
  %133 = vmatprep.subr.bf16.mxu0 0
  %134 = vmatpush1.bf16.msra.mxu0 0
  %135 = vmatprep.subr.bf16.mxu0 0
  %136 = vmatpush1.bf16.msra.mxu0 0
  %137 = vmatprep.subr.bf16.mxu0 0
  %138 = vmatpush1.bf16.msra.mxu0 0
  %139 = vmatprep.subr.bf16.mxu0 0
  %140 = vmatpush1.bf16.msra.mxu0 0
  %141 = vmatprep.subr.bf16.mxu0 0
  %142 = vmatpush1.bf16.msra.mxu0 0
  %143 = vmatprep.mubr.bf16.mxu0 0
  %144 = vmatmul.mubr.bf16.gmra.mrb[0].mxu0 %v59
  %v145 = vpop.f32.mrb[0].mxu0
  %v146 = vadd.f32 0.0, %v145
  %v147 = vpop.f32.mrb[0].mxu0
  %v148 = vpop.f32.mrb[0].mxu0
  %v149 = vadd.f32 0.0, %v148
  %v150 = vpop.f32.mrb[0].mxu0
  %151 = vmatprep.mubr.bf16.mxu0 0
  %152 = vmatmul.mubr.bf16.gmra.mrb[0].mxu0 %v60
  %v153 = vpop.f32.mrb[0].mxu0
  %v154 = vadd.f32 0.0, %v153
  %v155 = vpop.f32.mrb[0].mxu0
  %v156 = vpop.f32.mrb[0].mxu0
  %v157 = vadd.f32 0.0, %v156
  %v158 = vpop.f32.mrb[0].mxu0
  %159 = vdwg.mxu0
  %v160 = vadd.f32 %v27, %v146
  %v161 = vadd.f32 %v28, %v149
  %v162 = vadd.f32 %v29, %v154
  %v163 = vadd.f32 %v30, %v157
  %164 = vst [vmem:[#allocation2] sm:$0xff] %v160
  %165 = vst [vmem:[#allocation2 + $0x8] sm:$0xff] %v161
  %166 = vst [vmem:[#allocation2 + $0x10] sm:$0xff] %v162
  %167 = vst [vmem:[#allocation2 + $0x18] sm:$0xff] %v163
  // Predicated region
  $region22: #{down_block_pix_forward.6} parent=0 // pred_check
    %p168 = pneg %p19
  $region23: #{down_block_pix_forward.6} parent=0 // pred_check_branch
    %170 = sbr.rel (%p168) target = $region25
  $region24: #{down_block_pix_forward.6} parent=0 // pred_region
    %v171 = vld [vmem:[#allocation2] sm:$0xff]
    %v172 = vld [vmem:[#allocation2 + $0x8] sm:$0xff]
    %v173 = vld [vmem:[#allocation2 + $0x10] sm:$0xff]
    %v174 = vld [vmem:[#allocation2 + $0x18] sm:$0xff]
    %v175 = vld [vmem:[%s2] sm:$0xff]
    %v176 = vld [vmem:[%s2 + $0x8] sm:$0xff]
    %v177 = vld [vmem:[%s2 + $0x10] sm:$0xff]
    %v178 = vld [vmem:[%s2 + $0x18] sm:$0xff]
    %180 = vset.pattern.permute.xlu0 0
    %181 = vperm.xlu0 %180, %v175
    %v182 = vpop.permute.xlu0 %181
    %185 = vset.pattern.permute.xlu0 0
    %186 = vperm.xlu0 %185, %v176
    %v187 = vpop.permute.xlu0 %186
    %190 = vset.pattern.permute.xlu0 0
    %191 = vperm.xlu0 %190, %v177
    %v192 = vpop.permute.xlu0 %191
    %195 = vset.pattern.permute.xlu0 0
    %196 = vperm.xlu0 %195, %v178
    %v197 = vpop.permute.xlu0 %196
    %v199 = vadd.f32 %v171, %v182
    %v200 = vadd.f32 %v172, %v187
    %v201 = vadd.f32 %v173, %v192
    %v202 = vadd.f32 %v174, %v197
    %s203 = sld [smem:[#allocation3]]
    %v204 = vmax.f32 %v199, 0.0
    %v205 = vmax.f32 %v200, 0.0
    %v206 = vmax.f32 %v201, 0.0
    %v207 = vmax.f32 %v202, 0.0
    %v208 = vmin.f32 %v199, 0.0
    %v209 = vmin.f32 %v200, 0.0
    %v210 = vmin.f32 %v201, 0.0
    %v211 = vmin.f32 %v202, 0.0
    %v212 = vstv %s203
    %v213 = vmul.f32 %v212, %v208
    %v214 = vmul.f32 %v212, %v209
    %v215 = vmul.f32 %v212, %v210
    %v216 = vmul.f32 %v212, %v211
    %v217 = vadd.f32 %v204, %v213
    %v218 = vadd.f32 %v205, %v214
    %v219 = vadd.f32 %v206, %v215
    %v220 = vadd.f32 %v207, %v216
    %v221 = vpack.c.bf16 %v218, %v217
    %v222 = vpack.c.bf16 %v220, %v219
    %v225 = vunpack.c.l.b16 %v221
    %v226 = vunpack.c.h.b16 %v221
    %v227 = vunpack.c.l.b16 %v222
    %v228 = vunpack.c.h.b16 %v222
    %v229 = vpack.c.b16 %v225, %v225
    %v230 = vpack.c.b16 %v226, %v226
    %v231 = vpack.c.b16 %v227, %v227
    %v232 = vpack.c.b16 %v228, %v228
    %237 = vst [vmem:[%s4] sm:$0xf] %v229
    %238 = vst [vmem:[%s4 + $0x4] sm:$0xf] %v230
    %239 = vst [vmem:[%s4 + $0x8] sm:$0xf] %v231
    %240 = vst [vmem:[%s4 + $0xc] sm:$0xf] %v232
  $region25: #{down_block_pix_forward.6} parent=0 // pred_fallthru
    _
  // Predicated region
  $region26: #{down_block_pix_forward.6} parent=0 // pred_check
    _
  $region27: #{down_block_pix_forward.6} parent=0 // pred_check_branch
    %242 = sbr.rel (0) target = $region29
  $region28: #{down_block_pix_forward.6} parent=0 // pred_region
    _
  $region29: #{down_block_pix_forward.6} parent=0 // pred_fallthru
    _
  // Predicated region
  $region30: #{down_block_pix_forward.6} parent=0 // pred_check
    _
  $region31: #{down_block_pix_forward.6} parent=0 // pred_check_branch
    %244 = sbr.rel (0) target = $region33
  $region32: #{down_block_pix_forward.6} parent=0 // pred_region
    _
  $region33: #{down_block_pix_forward.6} parent=0 // pred_fallthru
    _

// kernel: down_block_pix_forward.8
$region0: #{down_block_pix_forward.8}
  #allocation0 [shape = 'u32[]', space=smem, size = 0x4, offset = 0x4, fixed_abs, tag = 'smem constant byte address 0x4 - core index']
  #allocation1 [shape = 'u32[144,128]{1,0:T(1,128)}', space=vmem, size = 0x12000, scoped, tag = 'internal scratch']
  #allocation2 [shape = 'f32[1]{0:T(128)S(6)}', space=smem, size = 0x200, scoped, tag = 'scoped memory for down_block_pix_forward.8']
  %s0 = inlined_call_operand.vmem [shape: bf16[16,512], index: 0, kind: input, shape index: {}]
  %s1 = inlined_call_operand.vmem [shape: bf16[16,512], index: 1, kind: input, shape index: {}]
  %s2 = inlined_call_operand.<no memory space> [shape: f32[1], index: 2, kind: input, shape index: {}]
  %s3 = inlined_call_operand.vmem [shape: bf16[16,512], index: 3, kind: output, shape index: {}]
  %s4 = sld [smem:[#allocation0]]
  $region22: #{down_block_pix_forward.8} parent=0
    _
  %s6 = ssub.s32 1, %s4
  %s7 = scalar_select 0, %s6, %s4
  %8 = sst [smem:[#allocation2]] %s2
  // Predicated region
  $region2: #{down_block_pix_forward.8} parent=0 // pred_check
    _
  $region3: #{down_block_pix_forward.8} parent=0 // pred_check_branch
    %10 = sbr.rel (0) target = $region5
  $region4: #{down_block_pix_forward.8} parent=0 // pred_region
    _
  $region5: #{down_block_pix_forward.8} parent=0 // pred_fallthru
    _
  // Predicated region
  $region6: #{down_block_pix_forward.8} parent=0 // pred_check
    _
  $region7: #{down_block_pix_forward.8} parent=0 // pred_check_branch
    %12 = sbr.rel (0) target = $region9
  $region8: #{down_block_pix_forward.8} parent=0 // pred_region
    _
  $region9: #{down_block_pix_forward.8} parent=0 // pred_fallthru
    _
  // Predicated region
  $region10: #{down_block_pix_forward.8} parent=0 // pred_check
    _
  $region11: #{down_block_pix_forward.8} parent=0 // pred_check_branch
    %14 = sbr.rel (0) target = $region13
  $region12: #{down_block_pix_forward.8} parent=0 // pred_region
    _
  $region13: #{down_block_pix_forward.8} parent=0 // pred_fallthru
    _
  %s15 = sld [smem:[#allocation2]]
  %v16 = vld [vmem:[%s0] sm:$0xff]
  %v17 = vld [vmem:[%s0 + $0x8] sm:$0xff]
  %v18 = vld [vmem:[%s0 + $0x10] sm:$0xff]
  %v19 = vld [vmem:[%s0 + $0x18] sm:$0xff]
  %v20 = vunpack.c.l.bf16 %v16
  %v21 = vunpack.c.h.bf16 %v16
  %v22 = vunpack.c.l.bf16 %v17
  %v23 = vunpack.c.h.bf16 %v17
  %v24 = vunpack.c.l.bf16 %v18
  %v25 = vunpack.c.h.bf16 %v18
  %v26 = vunpack.c.l.bf16 %v19
  %v27 = vunpack.c.h.bf16 %v19
  %v28 = vld [vmem:[%s1] sm:$0xff]
  %v29 = vld [vmem:[%s1 + $0x8] sm:$0xff]
  %v30 = vld [vmem:[%s1 + $0x10] sm:$0xff]
  %v31 = vld [vmem:[%s1 + $0x18] sm:$0xff]
  %v32 = vunpack.c.l.bf16 %v28
  %v33 = vunpack.c.h.bf16 %v28
  %v34 = vunpack.c.l.bf16 %v29
  %v35 = vunpack.c.h.bf16 %v29
  %v36 = vunpack.c.l.bf16 %v30
  %v37 = vunpack.c.h.bf16 %v30
  %v38 = vunpack.c.l.bf16 %v31
  %v39 = vunpack.c.h.bf16 %v31
  %v40 = vmax.f32 %v20, 0.0
  %v41 = vmax.f32 %v21, 0.0
  %v42 = vmax.f32 %v22, 0.0
  %v43 = vmax.f32 %v23, 0.0
  %v44 = vmax.f32 %v24, 0.0
  %v45 = vmax.f32 %v25, 0.0
  %v46 = vmax.f32 %v26, 0.0
  %v47 = vmax.f32 %v27, 0.0
  %v48 = vmin.f32 %v20, 0.0
  %v49 = vmin.f32 %v21, 0.0
  %v50 = vmin.f32 %v22, 0.0
  %v51 = vmin.f32 %v23, 0.0
  %v52 = vmin.f32 %v24, 0.0
  %v53 = vmin.f32 %v25, 0.0
  %v54 = vmin.f32 %v26, 0.0
  %v55 = vmin.f32 %v27, 0.0
  %v56 = vstv %s15
  %v57 = vmul.f32 %v56, %v48
  %v58 = vmul.f32 %v56, %v49
  %v59 = vmul.f32 %v56, %v50
  %v60 = vmul.f32 %v56, %v51
  %v61 = vmul.f32 %v56, %v52
  %v62 = vmul.f32 %v56, %v53
  %v63 = vmul.f32 %v56, %v54
  %v64 = vmul.f32 %v56, %v55
  %v65 = vadd.f32 %v40, %v57
  %v66 = vadd.f32 %v41, %v58
  %v67 = vadd.f32 %v42, %v59
  %v68 = vadd.f32 %v43, %v60
  %v69 = vadd.f32 %v44, %v61
  %v70 = vadd.f32 %v45, %v62
  %v71 = vadd.f32 %v46, %v63
  %v72 = vadd.f32 %v47, %v64
  %v73 = vsub.f32 %v65, %v32
  %v74 = vsub.f32 %v66, %v33
  %v75 = vsub.f32 %v67, %v34
  %v76 = vsub.f32 %v68, %v35
  %v77 = vsub.f32 %v69, %v36
  %v78 = vsub.f32 %v70, %v37
  %v79 = vsub.f32 %v71, %v38
  %v80 = vsub.f32 %v72, %v39
  %v81 = vpack.c.bf16 %v77, %v73
  %v82 = vpack.c.bf16 %v78, %v74
  %v83 = vpack.c.bf16 %v79, %v75
  %v84 = vpack.c.bf16 %v80, %v76
  %v89 = vunpack.c.l.b16 %v81
  %v90 = vunpack.c.l.b16 %v82
  %v91 = vunpack.c.l.b16 %v83
  %v92 = vunpack.c.l.b16 %v84
  %v93 = vunpack.c.h.b16 %v81
  %v94 = vunpack.c.h.b16 %v82
  %v95 = vunpack.c.h.b16 %v83
  %v96 = vunpack.c.h.b16 %v84
  %v97 = vpack.c.b16 %v90, %v89
  %v98 = vpack.c.b16 %v92, %v91
  %v99 = vpack.c.b16 %v94, %v93
  %v100 = vpack.c.b16 %v96, %v95
  %105 = vst [vmem:[%s3] sm:$0xff] %v97
  %106 = vst [vmem:[%s3 + $0x8] sm:$0xff] %v98
  %107 = vst [vmem:[%s3 + $0x10] sm:$0xff] %v99
  %108 = vst [vmem:[%s3 + $0x18] sm:$0xff] %v100
  // Predicated region
  $region14: #{down_block_pix_forward.8} parent=0 // pred_check
    _
  $region15: #{down_block_pix_forward.8} parent=0 // pred_check_branch
    %110 = sbr.rel (0) target = $region17
  $region16: #{down_block_pix_forward.8} parent=0 // pred_region
    _
  $region17: #{down_block_pix_forward.8} parent=0 // pred_fallthru
    _
  // Predicated region
  $region18: #{down_block_pix_forward.8} parent=0 // pred_check
    _
  $region19: #{down_block_pix_forward.8} parent=0 // pred_check_branch
    %112 = sbr.rel (0) target = $region21
  $region20: #{down_block_pix_forward.8} parent=0 // pred_region
    _
  $region21: #{down_block_pix_forward.8} parent=0 // pred_fallthru
    _

// kernel: down_block_pix_forward.9
$region0: #{down_block_pix_forward.9}
  #allocation0 [shape = 'u32[]', space=smem, size = 0x4, offset = 0x4, fixed_abs, tag = 'smem constant byte address 0x4 - core index']
  #allocation1 [shape = 'u32[144,128]{1,0:T(1,128)}', space=vmem, size = 0x12000, scoped, tag = 'internal scratch']
  #allocation2 [shape = 'f32[16,128]{1,0:T(8,128)}', space=vmem, size = 0x2000, scoped, tag = 'scratch operand']
  #allocation3 [shape = 'f32[1]{0:T(128)S(6)}', space=smem, size = 0x200, scoped, tag = 'scoped memory for down_block_pix_forward.9']
  %s0 = inlined_call_operand.vmem [shape: bf16[16,512], index: 0, kind: input, shape index: {}]
  %s1 = inlined_call_operand.vmem [shape: bf16[512,128], index: 1, kind: input, shape index: {}]
  %s2 = inlined_call_operand.vmem [shape: f32[16,1], index: 2, kind: input, shape index: {}]
  %s3 = inlined_call_operand.<no memory space> [shape: f32[1], index: 3, kind: input, shape index: {}]
  %s4 = inlined_call_operand.vmem [shape: bf16[16,128], index: 4, kind: input, shape index: {}]
  %s5 = inlined_call_operand.vmem [shape: f32[16,128], index: 5, kind: output, shape index: {}]
  %s6 = sld [smem:[#allocation0]]
  $region38: #{down_block_pix_forward.9} parent=0
    _
  %s8 = ssub.s32 1, %s6
  %s9 = scalar_select 0, %s8, %s6
  %10 = sst [smem:[#allocation3]] %s3
  // Predicated region
  $region2: #{down_block_pix_forward.9} parent=0 // pred_check
    _
  $region3: #{down_block_pix_forward.9} parent=0 // pred_check_branch
    %12 = sbr.rel (0) target = $region5
  $region4: #{down_block_pix_forward.9} parent=0 // pred_region
    _
  $region5: #{down_block_pix_forward.9} parent=0 // pred_fallthru
    _
  // Predicated region
  $region6: #{down_block_pix_forward.9} parent=0 // pred_check
    _
  $region7: #{down_block_pix_forward.9} parent=0 // pred_check_branch
    %14 = sbr.rel (0) target = $region9
  $region8: #{down_block_pix_forward.9} parent=0 // pred_region
    _
  $region9: #{down_block_pix_forward.9} parent=0 // pred_fallthru
    _
  // Predicated region
  $region10: #{down_block_pix_forward.9} parent=0 // pred_check
    _
  $region11: #{down_block_pix_forward.9} parent=0 // pred_check_branch
    %16 = sbr.rel (0) target = $region13
  $region12: #{down_block_pix_forward.9} parent=0 // pred_region
    _
  $region13: #{down_block_pix_forward.9} parent=0 // pred_fallthru
    _
  // Predicated region
  $region14: #{down_block_pix_forward.9} parent=0 // pred_check
    _
  $region15: #{down_block_pix_forward.9} parent=0 // pred_check_branch
    %18 = sbr.rel (0) target = $region17
  $region16: #{down_block_pix_forward.9} parent=0 // pred_region
    _
  $region17: #{down_block_pix_forward.9} parent=0 // pred_fallthru
    _
  // Predicated region
  $region18: #{down_block_pix_forward.9} parent=0 // pred_check
    _
  $region19: #{down_block_pix_forward.9} parent=0 // pred_check_branch
    %20 = sbr.rel (0) target = $region21
  $region20: #{down_block_pix_forward.9} parent=0 // pred_region
    _
  $region21: #{down_block_pix_forward.9} parent=0 // pred_fallthru
    _
  %p22 = scmp.eq.s32.totalorder 0, 0
  // Predicated region
  $region22: #{down_block_pix_forward.9} parent=0 // pred_check
    %p23 = pneg %p22
  $region23: #{down_block_pix_forward.9} parent=0 // pred_check_branch
    %25 = sbr.rel (%p23) target = $region25
  $region24: #{down_block_pix_forward.9} parent=0 // pred_region
    %26 = vst [vmem:[#allocation2] sm:$0xff] 0.0
    %27 = vst [vmem:[#allocation2 + $0x8] sm:$0xff] 0.0
  $region25: #{down_block_pix_forward.9} parent=0 // pred_fallthru
    _
  %v28 = vld [vmem:[#allocation2] sm:$0xff]
  %v29 = vld [vmem:[#allocation2 + $0x8] sm:$0xff]
  %v30 = vld [vmem:[%s0] sm:$0xff]
  %v31 = vld [vmem:[%s0 + $0x8] sm:$0xff]
  %v32 = vld [vmem:[%s0 + $0x10] sm:$0xff]
  %v33 = vld [vmem:[%s0 + $0x18] sm:$0xff]
  %v34 = vld [vmem:[%s1] sm:$0xf]
  %v35 = vld [vmem:[%s1 + $0x4] sm:$0xf]
  %v36 = vld [vmem:[%s1 + $0x8] sm:$0xf]
  %v37 = vld [vmem:[%s1 + $0xc] sm:$0xf]
  %v38 = vld [vmem:[%s1 + $0x10] sm:$0xf]
  %v39 = vld [vmem:[%s1 + $0x14] sm:$0xf]
  %v40 = vld [vmem:[%s1 + $0x18] sm:$0xf]
  %v41 = vld [vmem:[%s1 + $0x1c] sm:$0xf]
  %v42 = vld [vmem:[%s1 + $0x20] sm:$0xf]
  %v43 = vld [vmem:[%s1 + $0x24] sm:$0xf]
  %v44 = vld [vmem:[%s1 + $0x28] sm:$0xf]
  %v45 = vld [vmem:[%s1 + $0x2c] sm:$0xf]
  %v46 = vld [vmem:[%s1 + $0x30] sm:$0xf]
  %v47 = vld [vmem:[%s1 + $0x34] sm:$0xf]
  %v48 = vld [vmem:[%s1 + $0x38] sm:$0xf]
  %v49 = vld [vmem:[%s1 + $0x3c] sm:$0xf]
  %v50 = vld [vmem:[%s1 + $0x40] sm:$0xf]
  %v51 = vld [vmem:[%s1 + $0x44] sm:$0xf]
  %v52 = vld [vmem:[%s1 + $0x48] sm:$0xf]
  %v53 = vld [vmem:[%s1 + $0x4c] sm:$0xf]
  %v54 = vld [vmem:[%s1 + $0x50] sm:$0xf]
  %v55 = vld [vmem:[%s1 + $0x54] sm:$0xf]
  %v56 = vld [vmem:[%s1 + $0x58] sm:$0xf]
  %v57 = vld [vmem:[%s1 + $0x5c] sm:$0xf]
  %v58 = vld [vmem:[%s1 + $0x60] sm:$0xf]
  %v59 = vld [vmem:[%s1 + $0x64] sm:$0xf]
  %v60 = vld [vmem:[%s1 + $0x68] sm:$0xf]
  %v61 = vld [vmem:[%s1 + $0x6c] sm:$0xf]
  %v62 = vld [vmem:[%s1 + $0x70] sm:$0xf]
  %v63 = vld [vmem:[%s1 + $0x74] sm:$0xf]
  %v64 = vld [vmem:[%s1 + $0x78] sm:$0xf]
  %v65 = vld [vmem:[%s1 + $0x7c] sm:$0xf]
  %v66 = vld [vmem:[%s1 + $0x80] sm:$0xf]
  %v67 = vld [vmem:[%s1 + $0x84] sm:$0xf]
  %v68 = vld [vmem:[%s1 + $0x88] sm:$0xf]
  %v69 = vld [vmem:[%s1 + $0x8c] sm:$0xf]
  %v70 = vld [vmem:[%s1 + $0x90] sm:$0xf]
  %v71 = vld [vmem:[%s1 + $0x94] sm:$0xf]
  %v72 = vld [vmem:[%s1 + $0x98] sm:$0xf]
  %v73 = vld [vmem:[%s1 + $0x9c] sm:$0xf]
  %v74 = vld [vmem:[%s1 + $0xa0] sm:$0xf]
  %v75 = vld [vmem:[%s1 + $0xa4] sm:$0xf]
  %v76 = vld [vmem:[%s1 + $0xa8] sm:$0xf]
  %v77 = vld [vmem:[%s1 + $0xac] sm:$0xf]
  %v78 = vld [vmem:[%s1 + $0xb0] sm:$0xf]
  %v79 = vld [vmem:[%s1 + $0xb4] sm:$0xf]
  %v80 = vld [vmem:[%s1 + $0xb8] sm:$0xf]
  %v81 = vld [vmem:[%s1 + $0xbc] sm:$0xf]
  %v82 = vld [vmem:[%s1 + $0xc0] sm:$0xf]
  %v83 = vld [vmem:[%s1 + $0xc4] sm:$0xf]
  %v84 = vld [vmem:[%s1 + $0xc8] sm:$0xf]
  %v85 = vld [vmem:[%s1 + $0xcc] sm:$0xf]
  %v86 = vld [vmem:[%s1 + $0xd0] sm:$0xf]
  %v87 = vld [vmem:[%s1 + $0xd4] sm:$0xf]
  %v88 = vld [vmem:[%s1 + $0xd8] sm:$0xf]
  %v89 = vld [vmem:[%s1 + $0xdc] sm:$0xf]
  %v90 = vld [vmem:[%s1 + $0xe0] sm:$0xf]
  %v91 = vld [vmem:[%s1 + $0xe4] sm:$0xf]
  %v92 = vld [vmem:[%s1 + $0xe8] sm:$0xf]
  %v93 = vld [vmem:[%s1 + $0xec] sm:$0xf]
  %v94 = vld [vmem:[%s1 + $0xf0] sm:$0xf]
  %v95 = vld [vmem:[%s1 + $0xf4] sm:$0xf]
  %v96 = vld [vmem:[%s1 + $0xf8] sm:$0xf]
  %v97 = vld [vmem:[%s1 + $0xfc] sm:$0xf]
  %v102 = vunpack.c.l.b16 %v30
  %v103 = vunpack.c.h.b16 %v30
  %v104 = vunpack.c.l.b16 %v31
  %v105 = vunpack.c.h.b16 %v31
  %v106 = vunpack.c.l.b16 %v32
  %v107 = vunpack.c.h.b16 %v32
  %v108 = vunpack.c.l.b16 %v33
  %v109 = vunpack.c.h.b16 %v33
  %v110 = vpack.c.b16 %v106, %v102
  %v111 = vpack.c.b16 %v107, %v103
  %v112 = vpack.c.b16 %v108, %v104
  %v113 = vpack.c.b16 %v109, %v105
  %v182 = vunpack.c.l.b16 %v34
  %v183 = vunpack.c.l.b16 %v35
  %v184 = vunpack.c.l.b16 %v36
  %v185 = vunpack.c.l.b16 %v37
  %v186 = vunpack.c.l.b16 %v38
  %v187 = vunpack.c.l.b16 %v39
  %v188 = vunpack.c.l.b16 %v40
  %v189 = vunpack.c.l.b16 %v41
  %v190 = vunpack.c.l.b16 %v42
  %v191 = vunpack.c.l.b16 %v43
  %v192 = vunpack.c.l.b16 %v44
  %v193 = vunpack.c.l.b16 %v45
  %v194 = vunpack.c.l.b16 %v46
  %v195 = vunpack.c.l.b16 %v47
  %v196 = vunpack.c.l.b16 %v48
  %v197 = vunpack.c.l.b16 %v49
  %v198 = vunpack.c.l.b16 %v50
  %v199 = vunpack.c.l.b16 %v51
  %v200 = vunpack.c.l.b16 %v52
  %v201 = vunpack.c.l.b16 %v53
  %v202 = vunpack.c.l.b16 %v54
  %v203 = vunpack.c.l.b16 %v55
  %v204 = vunpack.c.l.b16 %v56
  %v205 = vunpack.c.l.b16 %v57
  %v206 = vunpack.c.l.b16 %v58
  %v207 = vunpack.c.l.b16 %v59
  %v208 = vunpack.c.l.b16 %v60
  %v209 = vunpack.c.l.b16 %v61
  %v210 = vunpack.c.l.b16 %v62
  %v211 = vunpack.c.l.b16 %v63
  %v212 = vunpack.c.l.b16 %v64
  %v213 = vunpack.c.l.b16 %v65
  %v214 = vunpack.c.l.b16 %v66
  %v215 = vunpack.c.l.b16 %v67
  %v216 = vunpack.c.l.b16 %v68
  %v217 = vunpack.c.l.b16 %v69
  %v218 = vunpack.c.l.b16 %v70
  %v219 = vunpack.c.l.b16 %v71
  %v220 = vunpack.c.l.b16 %v72
  %v221 = vunpack.c.l.b16 %v73
  %v222 = vunpack.c.l.b16 %v74
  %v223 = vunpack.c.l.b16 %v75
  %v224 = vunpack.c.l.b16 %v76
  %v225 = vunpack.c.l.b16 %v77
  %v226 = vunpack.c.l.b16 %v78
  %v227 = vunpack.c.l.b16 %v79
  %v228 = vunpack.c.l.b16 %v80
  %v229 = vunpack.c.l.b16 %v81
  %v230 = vunpack.c.l.b16 %v82
  %v231 = vunpack.c.l.b16 %v83
  %v232 = vunpack.c.l.b16 %v84
  %v233 = vunpack.c.l.b16 %v85
  %v234 = vunpack.c.l.b16 %v86
  %v235 = vunpack.c.l.b16 %v87
  %v236 = vunpack.c.l.b16 %v88
  %v237 = vunpack.c.l.b16 %v89
  %v238 = vunpack.c.l.b16 %v90
  %v239 = vunpack.c.l.b16 %v91
  %v240 = vunpack.c.l.b16 %v92
  %v241 = vunpack.c.l.b16 %v93
  %v242 = vunpack.c.l.b16 %v94
  %v243 = vunpack.c.l.b16 %v95
  %v244 = vunpack.c.l.b16 %v96
  %v245 = vunpack.c.l.b16 %v97
  %v246 = vpack.c.b16 %v183, %v182
  %v247 = vpack.c.b16 %v185, %v184
  %v248 = vpack.c.b16 %v187, %v186
  %v249 = vpack.c.b16 %v189, %v188
  %v250 = vpack.c.b16 %v191, %v190
  %v251 = vpack.c.b16 %v193, %v192
  %v252 = vpack.c.b16 %v195, %v194
  %v253 = vpack.c.b16 %v197, %v196
  %v254 = vpack.c.b16 %v199, %v198
  %v255 = vpack.c.b16 %v201, %v200
  %v256 = vpack.c.b16 %v203, %v202
  %v257 = vpack.c.b16 %v205, %v204
  %v258 = vpack.c.b16 %v207, %v206
  %v259 = vpack.c.b16 %v209, %v208
  %v260 = vpack.c.b16 %v211, %v210
  %v261 = vpack.c.b16 %v213, %v212
  %v262 = vpack.c.b16 %v215, %v214
  %v263 = vpack.c.b16 %v217, %v216
  %v264 = vpack.c.b16 %v219, %v218
  %v265 = vpack.c.b16 %v221, %v220
  %v266 = vpack.c.b16 %v223, %v222
  %v267 = vpack.c.b16 %v225, %v224
  %v268 = vpack.c.b16 %v227, %v226
  %v269 = vpack.c.b16 %v229, %v228
  %v270 = vpack.c.b16 %v231, %v230
  %v271 = vpack.c.b16 %v233, %v232
  %v272 = vpack.c.b16 %v235, %v234
  %v273 = vpack.c.b16 %v237, %v236
  %v274 = vpack.c.b16 %v239, %v238
  %v275 = vpack.c.b16 %v241, %v240
  %v276 = vpack.c.b16 %v243, %v242
  %v277 = vpack.c.b16 %v245, %v244
  %310 = vmatprep.subr.bf16.mxu0 0
  %311 = vmatpush1.bf16.msra.mxu0 %v246
  %312 = vmatprep.subr.bf16.mxu0 0
  %313 = vmatpush1.bf16.msra.mxu0 %v247
  %314 = vmatprep.subr.bf16.mxu0 0
  %315 = vmatpush1.bf16.msra.mxu0 %v248
  %316 = vmatprep.subr.bf16.mxu0 0
  %317 = vmatpush1.bf16.msra.mxu0 %v249
  %318 = vmatprep.subr.bf16.mxu0 0
  %319 = vmatpush1.bf16.msra.mxu0 %v250
  %320 = vmatprep.subr.bf16.mxu0 0
  %321 = vmatpush1.bf16.msra.mxu0 %v251
  %322 = vmatprep.subr.bf16.mxu0 0
  %323 = vmatpush1.bf16.msra.mxu0 %v252
  %324 = vmatprep.subr.bf16.mxu0 0
  %325 = vmatpush1.bf16.msra.mxu0 %v253
  %326 = vmatprep.subr.bf16.mxu0 0
  %327 = vmatpush1.bf16.msra.mxu0 %v254
  %328 = vmatprep.subr.bf16.mxu0 0
  %329 = vmatpush1.bf16.msra.mxu0 %v255
  %330 = vmatprep.subr.bf16.mxu0 0
  %331 = vmatpush1.bf16.msra.mxu0 %v256
  %332 = vmatprep.subr.bf16.mxu0 0
  %333 = vmatpush1.bf16.msra.mxu0 %v257
  %334 = vmatprep.subr.bf16.mxu0 0
  %335 = vmatpush1.bf16.msra.mxu0 %v258
  %336 = vmatprep.subr.bf16.mxu0 0
  %337 = vmatpush1.bf16.msra.mxu0 %v259
  %338 = vmatprep.subr.bf16.mxu0 0
  %339 = vmatpush1.bf16.msra.mxu0 %v260
  %340 = vmatprep.subr.bf16.mxu0 0
  %341 = vmatpush1.bf16.msra.mxu0 %v261
  %342 = vmatprep.mubr.bf16.mxu0 %v111
  %343 = vmatmul.mubr.bf16.gmra.mrb[0].mxu0 %v110
  %v344 = vpop.f32.mrb[0].mxu0
  %v345 = vadd.f32 0.0, %v344
  %v346 = vpop.f32.mrb[0].mxu0
  %v347 = vpop.f32.mrb[0].mxu0
  %v348 = vadd.f32 0.0, %v347
  %v349 = vpop.f32.mrb[0].mxu0
  %350 = vdwg.mxu0
  %351 = vmatprep.subr.bf16.mxu0 0
  %352 = vmatpush1.bf16.msra.mxu0 %v262
  %353 = vmatprep.subr.bf16.mxu0 0
  %354 = vmatpush1.bf16.msra.mxu0 %v263
  %355 = vmatprep.subr.bf16.mxu0 0
  %356 = vmatpush1.bf16.msra.mxu0 %v264
  %357 = vmatprep.subr.bf16.mxu0 0
  %358 = vmatpush1.bf16.msra.mxu0 %v265
  %359 = vmatprep.subr.bf16.mxu0 0
  %360 = vmatpush1.bf16.msra.mxu0 %v266
  %361 = vmatprep.subr.bf16.mxu0 0
  %362 = vmatpush1.bf16.msra.mxu0 %v267
  %363 = vmatprep.subr.bf16.mxu0 0
  %364 = vmatpush1.bf16.msra.mxu0 %v268
  %365 = vmatprep.subr.bf16.mxu0 0
  %366 = vmatpush1.bf16.msra.mxu0 %v269
  %367 = vmatprep.subr.bf16.mxu0 0
  %368 = vmatpush1.bf16.msra.mxu0 %v270
  %369 = vmatprep.subr.bf16.mxu0 0
  %370 = vmatpush1.bf16.msra.mxu0 %v271
  %371 = vmatprep.subr.bf16.mxu0 0
  %372 = vmatpush1.bf16.msra.mxu0 %v272
  %373 = vmatprep.subr.bf16.mxu0 0
  %374 = vmatpush1.bf16.msra.mxu0 %v273
  %375 = vmatprep.subr.bf16.mxu0 0
  %376 = vmatpush1.bf16.msra.mxu0 %v274
  %377 = vmatprep.subr.bf16.mxu0 0
  %378 = vmatpush1.bf16.msra.mxu0 %v275
  %379 = vmatprep.subr.bf16.mxu0 0
  %380 = vmatpush1.bf16.msra.mxu0 %v276
  %381 = vmatprep.subr.bf16.mxu0 0
  %382 = vmatpush1.bf16.msra.mxu0 %v277
  %383 = vmatprep.mubr.bf16.mxu0 %v113
  %384 = vmatmul.mubr.bf16.gmra.mrb[0].mxu0 %v112
  %v385 = vpop.f32.mrb[0].mxu0
  %v386 = vadd.f32 %v345, %v385
  %v387 = vpop.f32.mrb[0].mxu0
  %v388 = vpop.f32.mrb[0].mxu0
  %v389 = vadd.f32 %v348, %v388
  %v390 = vpop.f32.mrb[0].mxu0
  %391 = vdwg.mxu0
  %v392 = vadd.f32 %v28, %v386
  %v393 = vadd.f32 %v29, %v389
  %394 = vst [vmem:[#allocation2] sm:$0xff] %v392
  %395 = vst [vmem:[#allocation2 + $0x8] sm:$0xff] %v393
  // Predicated region
  $region26: #{down_block_pix_forward.9} parent=0 // pred_check
    %p396 = pneg %p22
  $region27: #{down_block_pix_forward.9} parent=0 // pred_check_branch
    %398 = sbr.rel (%p396) target = $region29
  $region28: #{down_block_pix_forward.9} parent=0 // pred_region
    %v399 = vld [vmem:[#allocation2] sm:$0xff]
    %v400 = vld [vmem:[#allocation2 + $0x8] sm:$0xff]
    %v401 = vld [vmem:[%s2] sm:$0xff]
    %v402 = vld [vmem:[%s2 + $0x8] sm:$0xff]
    %404 = vset.pattern.permute.xlu0 0
    %405 = vperm.xlu0 %404, %v401
    %v406 = vpop.permute.xlu0 %405
    %409 = vset.pattern.permute.xlu0 0
    %410 = vperm.xlu0 %409, %v402
    %v411 = vpop.permute.xlu0 %410
    %v413 = vadd.f32 %v399, %v406
    %v414 = vadd.f32 %v400, %v411
    %s415 = sld [smem:[#allocation3]]
    %v416 = vmax.f32 %v413, 0.0
    %v417 = vmax.f32 %v414, 0.0
    %v418 = vmin.f32 %v413, 0.0
    %v419 = vmin.f32 %v414, 0.0
    %v420 = vstv %s415
    %v421 = vmul.f32 %v420, %v418
    %v422 = vmul.f32 %v420, %v419
    %v423 = vadd.f32 %v416, %v421
    %v424 = vadd.f32 %v417, %v422
    %v425 = vld [vmem:[%s4] sm:$0xf]
    %v426 = vld [vmem:[%s4 + $0x4] sm:$0xf]
    %v427 = vunpack.c.l.bf16 %v425
    %v428 = vunpack.c.l.bf16 %v426
    %v429 = vadd.f32 %v423, %v427
    %v430 = vadd.f32 %v424, %v428
    %431 = vst [vmem:[%s5] sm:$0xff] %v429
    %432 = vst [vmem:[%s5 + $0x8] sm:$0xff] %v430
  $region29: #{down_block_pix_forward.9} parent=0 // pred_fallthru
    _
  // Predicated region
  $region30: #{down_block_pix_forward.9} parent=0 // pred_check
    _
  $region31: #{down_block_pix_forward.9} parent=0 // pred_check_branch
    %434 = sbr.rel (0) target = $region33
  $region32: #{down_block_pix_forward.9} parent=0 // pred_region
    _
  $region33: #{down_block_pix_forward.9} parent=0 // pred_fallthru
    _
  // Predicated region
  $region34: #{down_block_pix_forward.9} parent=0 // pred_check
    _
  $region35: #{down_block_pix_forward.9} parent=0 // pred_check_branch
    %436 = sbr.rel (0) target = $region37
  $region36: #{down_block_pix_forward.9} parent=0 // pred_region
    _
  $region37: #{down_block_pix_forward.9} parent=0 // pred_fallthru
    _

</llo_original>
